<compile_context>
chip_gen: v6e
topology: v6e:2x2x1
jax: 0.10.0
libtpu: 0.0.40
codegen_flags: <defaults>
</compile_context>

<pallas_src>
import jax
import jax.numpy as jnp
import numpy as np
from jax import lax
from jax.experimental import pallas as pl
from jax.experimental.pallas import tpu as pltpu


# Streaming / matmul dtype (gx tiles, recurrent weights, layer outputs).
# Gate accumulation and h/c state are always float32.
STREAM_DTYPE = jnp.bfloat16


# -----------------------------------------------------------------------------
# Pallas kernel: one time-chunk of a bidirectional LSTM layer (both directions,
# interleaved in a single loop body).
# -----------------------------------------------------------------------------
def bilstm_chunk_kernel(gxf_ref, gxb_ref, whf_ref, whb_ref,
                        outf_ref, outb_ref,
                        hf_scr, cf_scr, hb_scr, cb_scr):
    """Process Tc timesteps of both LSTM directions.

    gxf_ref : (Tc, B, 4H) bf16  precomputed x@W_ih_f + b_f for forward chunk c
    gxb_ref : (Tc, B, 4H) bf16  precomputed x@W_ih_b + b_b for chunk (nc-1-c)
    whf_ref : (H, 4H)     bf16  forward recurrent weights (VMEM resident)
    whb_ref : (H, 4H)     bf16  backward recurrent weights (VMEM resident)
    outf_ref: (Tc, B, H)  bf16  forward hidden states for chunk c
    outb_ref: (Tc, B, H)  bf16  backward hidden states for chunk (nc-1-c)
    scratch : per-direction (B, H) f32 h / c state carried across grid steps
    """
    c = pl.program_id(0)

    @pl.when(c == 0)
    def _():
        hf_scr[...] = jnp.zeros_like(hf_scr)
        cf_scr[...] = jnp.zeros_like(cf_scr)
        hb_scr[...] = jnp.zeros_like(hb_scr)
        cb_scr[...] = jnp.zeros_like(cb_scr)

    tc = gxf_ref.shape[0]
    hidden = whf_ref.shape[0]

    # Resident weight loads hoisted out of the loop (bf16, MXU-native).
    whf = whf_ref[...]
    whb = whb_ref[...]

    def cell(gates, c_prev):
        # PyTorch gate order: i, f, g, o.  One sigmoid launch covers the
        # contiguous [i|f] slab (fewer EUP pushes per step).
        if_g = jax.nn.sigmoid(gates[:, 0:2 * hidden])
        i_g = if_g[:, :hidden]
        f_g = if_g[:, hidden:]
        g_g = jnp.tanh(gates[:, 2 * hidden:3 * hidden])
        o_g = jax.nn.sigmoid(gates[:, 3 * hidden:4 * hidden])
        c_new = f_g * c_prev + i_g * g_g
        h_new = o_g * jnp.tanh(c_new)
        return h_new, c_new

    # Interleaved step: forward processes in-chunk index s (ascending), the
    # backward direction processes index tc-1-s (descending).  The two chains
    # are independent, so their matmul/EUP latencies overlap.
    def step(s, carry):
        hf, cf, hb, cb = carry
        sb = tc - 1 - s
        gates_f = gxf_ref[s].astype(jnp.float32) + jnp.dot(
            hf.astype(STREAM_DTYPE), whf, preferred_element_type=jnp.float32)
        gates_b = gxb_ref[sb].astype(jnp.float32) + jnp.dot(
            hb.astype(STREAM_DTYPE), whb, preferred_element_type=jnp.float32)
        hf, cf = cell(gates_f, cf)
        hb, cb = cell(gates_b, cb)
        outf_ref[s] = hf.astype(outf_ref.dtype)
        outb_ref[sb] = hb.astype(outb_ref.dtype)
        return (hf, cf, hb, cb)

    # Cap effective unroll at 8 to bound vreg pressure at large B*4H.
    hf, cf, hb, cb = lax.fori_loop(
        0, tc, step,
        (hf_scr[...], cf_scr[...], hb_scr[...], cb_scr[...]),
        unroll=min(tc, 8))

    hf_scr[...] = hf
    cf_scr[...] = cf
    hb_scr[...] = hb
    cb_scr[...] = cb


# -----------------------------------------------------------------------------
# Chunk planning: largest Tc within a VMEM tile budget; T padded to nc*Tc.
# -----------------------------------------------------------------------------
def _plan_chunks(T, B, H, max_chunk=128, tile_budget_bytes=24 << 20):
    def bytes_per_step(tc):
        return (2 * 2 * tc * B * 4 * H * 2      # gx fwd/bwd, double-buffered, bf16
                + 2 * 2 * tc * B * H * 2        # out fwd/bwd, double-buffered, bf16
                + 2 * H * 4 * H * 2             # resident W_hh (single-buffered)
                + 4 * B * H * 4)                # f32 h/c scratch

    tc = min(max_chunk, T)
    while tc > 1 and bytes_per_step(tc) > tile_budget_bytes:
        tc //= 2
    nc = -(-T // tc)                            # ceil division
    Tp = nc * tc
    vmem_limit = int(max(32 << 20, min(64 << 20, 2 * bytes_per_step(tc))))
    return tc, Tp, vmem_limit


def run_bilstm_layer(gx_fwd, gx_bwd, w_hh_fwd, w_hh_bwd, time_chunk,
                     vmem_limit_bytes):
    """One bidirectional LSTM layer over a (padded) full sequence.

    gx_fwd, gx_bwd : (Tp, B, 4H) bf16 precomputed input projections (+bias)
    w_hh_fwd/bwd   : (H, 4H)     bf16
    returns (out_fwd, out_bwd), each (Tp, B, H) bf16
    """
    Tp, B, G = gx_fwd.shape
    H = w_hh_fwd.shape[0]
    nc = Tp // time_chunk

    fw_map = lambda c: (c, 0, 0)
    rev_map = lambda c: (nc - 1 - c, 0, 0)      # time reversal via DMA addressing

    return pl.pallas_call(
        bilstm_chunk_kernel,
        out_shape=(jax.ShapeDtypeStruct((Tp, B, H), STREAM_DTYPE),
                   jax.ShapeDtypeStruct((Tp, B, H), STREAM_DTYPE)),
        grid_spec=pltpu.PrefetchScalarGridSpec(
            num_scalar_prefetch=0,
            grid=(nc,),
            in_specs=[
                pl.BlockSpec((time_chunk, B, G), fw_map),
                pl.BlockSpec((time_chunk, B, G), rev_map),
                # Whole-array VMEM residents: no double-buffering of weights.
                pl.BlockSpec(memory_space=pltpu.MemorySpace.VMEM),
                pl.BlockSpec(memory_space=pltpu.MemorySpace.VMEM),
            ],
            out_specs=(
                pl.BlockSpec((time_chunk, B, H), fw_map),
                pl.BlockSpec((time_chunk, B, H), rev_map),
            ),
            scratch_shapes=[
                pltpu.VMEM((B, H), jnp.float32),   # h fwd
                pltpu.VMEM((B, H), jnp.float32),   # c fwd
                pltpu.VMEM((B, H), jnp.float32),   # h bwd
                pltpu.VMEM((B, H), jnp.float32),   # c bwd
            ],
        ),
        compiler_params=pltpu.CompilerParams(
            dimension_semantics=("arbitrary",),
            vmem_limit_bytes=vmem_limit_bytes),
    )(gx_fwd, gx_bwd, w_hh_fwd, w_hh_bwd)


def text_rnn_forward(tokens, params, max_time_chunk=128):
    """tokens: (B, T) int32 -> logits (B, num_tags)."""
    B, T = tokens.shape
    H = params["lstm_layers"][0]["fwd"]["w_hh"].shape[0]
    time_chunk, Tp, vmem_limit = _plan_chunks(T, B, H, max_chunk=max_time_chunk)
    pad = Tp - T

    # Embedding gather, produced time-major directly: (T, B, E), bf16 stream.
    x = jnp.take(params["embedding"], tokens.T, axis=0).astype(STREAM_DTYPE)

    for layer in params["lstm_layers"]:
        gx = {}
        for d in ("fwd", "bwd"):
            # Hoisted input projection for the whole sequence: one big bf16
            # matmul per direction (K = 2H for layers > 0), f32 accumulation,
            # then stored as a bf16 stream for the serial kernel.
            g = jnp.einsum("tbi,ig->tbg", x, layer[d]["w_ih"],
                           preferred_element_type=jnp.float32)
            gx[d] = (g + layer[d]["bias"]).astype(STREAM_DTYPE)

        if pad:
            # Forward: pad at the END of time; backward: pad at the FRONT so
            # that padded (zero-gx) steps are processed only AFTER all real
            # steps in each direction's processing order -> no state
            # corruption, no in-kernel masking needed.
            gxf = jnp.pad(gx["fwd"], ((0, pad), (0, 0), (0, 0)))
            gxb = jnp.pad(gx["bwd"], ((pad, 0), (0, 0), (0, 0)))
        else:
            gxf, gxb = gx["fwd"], gx["bwd"]

        out_f, out_b = run_bilstm_layer(
            gxf, gxb, layer["fwd"]["w_hh"], layer["bwd"]["w_hh"],
            time_chunk, vmem_limit)

        if pad:
            out_f = out_f[:T]          # real forward outputs at positions 0..T-1
            out_b = out_b[pad:]        # real backward outputs at positions pad..Tp-1

        # Concatenated bidirectional output feeds the next layer (K = 2H
        # contraction) and the final readout.
        x = jnp.concatenate([out_f, out_b], axis=-1)   # (T, B, 2H) bf16

    # Final Linear on the last timestep (f32).
    h_last = x[T - 1].astype(jnp.float32)              # (B, 2H)
    logits = h_last @ params["fc_w"] + params["fc_b"]
    return logits


# -----------------------------------------------------------------------------
# Deterministic parameter construction (xavier-normal weights, zero biases,
# normal embedding with padding_idx 0 zeroed) -- mirrors TextRnn.__init__.
# -----------------------------------------------------------------------------
def xavier_normal(key, shape):
    fan_out, fan_in = shape[0], shape[1]
    std = float(np.sqrt(2.0 / (fan_in + fan_out)))
    return jax.random.normal(key, shape, jnp.float32) * std


def make_params(key, vocab_size, emb_size, hidden_size, num_layers, num_tags):
    keys = iter(jax.random.split(key, 2 + num_layers * 4))

    embedding = jax.random.normal(next(keys), (vocab_size, emb_size),
                                  jnp.float32)
    embedding = embedding.at[0].set(0.0)                   # padding_idx=0

    layers = []
    for l in range(num_layers):
        in_size = emb_size if l == 0 else 2 * hidden_size
        layer = {}
        for direction in ("fwd", "bwd"):
            w_ih = xavier_normal(next(keys), (4 * hidden_size, in_size))
            w_hh = xavier_normal(next(keys), (4 * hidden_size, hidden_size))
            layer[direction] = {
                "w_ih": jnp.transpose(w_ih).astype(STREAM_DTYPE),   # (in, 4H)
                "w_hh": jnp.transpose(w_hh).astype(STREAM_DTYPE),   # (H, 4H)
                # b_ih, b_hh initialised to 0 -> combined hoisted bias is 0
                "bias": jnp.zeros((4 * hidden_size,), jnp.float32),
            }
        layers.append(layer)

    fc_w = xavier_normal(next(keys), (num_tags, 2 * hidden_size))
    return {
        "embedding": embedding,
        "lstm_layers": layers,
        "fc_w": jnp.transpose(fc_w),                        # (2H, tags)
        "fc_b": jnp.zeros((1, num_tags), jnp.float32),
    }


# -----------------------------------------------------------------------------
# Pure-JAX f32 reference (lax.scan) for correctness check
# -----------------------------------------------------------------------------
def lstm_direction_ref(x_tbe, w_ih, w_hh, bias):
    T, B, _ = x_tbe.shape
    H = w_hh.shape[0]

    def step(carry, x_t):
        h, c = carry
        gates = x_t @ w_ih + h @ w_hh + bias
        i = jax.nn.sigmoid(gates[:, 0 * H:1 * H])
        f = jax.nn.sigmoid(gates[:, 1 * H:2 * H])
        g = jnp.tanh(gates[:, 2 * H:3 * H])
        o = jax.nn.sigmoid(gates[:, 3 * H:4 * H])
        c = f * c + i * g
        h = o * jnp.tanh(c)
        return (h, c), h

    init = (jnp.zeros((B, H), jnp.float32), jnp.zeros((B, H), jnp.float32))
    _, hs = lax.scan(step, init, x_tbe)
    return hs


def text_rnn_ref(tokens, params):
    emb = jnp.take(params["embedding"], tokens, axis=0)
    x = jnp.transpose(emb, (1, 0, 2)).astype(jnp.float32)
    for layer in params["lstm_layers"]:
        fwd = lstm_direction_ref(x, layer["fwd"]["w_ih"].astype(jnp.float32),
                                 layer["fwd"]["w_hh"].astype(jnp.float32),
                                 layer["fwd"]["bias"])
        bwd = lstm_direction_ref(x[::-1],
                                 layer["bwd"]["w_ih"].astype(jnp.float32),
                                 layer["bwd"]["w_hh"].astype(jnp.float32),
                                 layer["bwd"]["bias"])[::-1]
        x = jnp.concatenate([fwd, bwd], axis=-1)
    return x[-1] @ params["fc_w"] + params["fc_b"]


# -----------------------------------------------------------------------------
if __name__ == "__main__":
    # Small demo shapes (note: production sizes should use B % 8 == 0 and
    # H % 128 == 0 for lane/sublane-aligned gate slices and dense stores).
    B, T = 2, 12
    VOCAB, EMB, HIDDEN, NUM_LAYERS, NUM_TAGS = 50, 32, 32, 2, 4

    root = jax.random.PRNGKey(0)
    k_tok, k_par = jax.random.split(root)

    tokens = jax.random.randint(k_tok, (B, T), 1, VOCAB, dtype=jnp.int32)
    params = make_params(k_par, VOCAB, EMB, HIDDEN, NUM_LAYERS, NUM_TAGS)

    # max_time_chunk=8 so T=12 exercises the padded-chunk path (Tc=8, Tp=16).
    fwd_fn = jax.jit(lambda t, p: text_rnn_forward(t, p, max_time_chunk=8))
    logits = jax.block_until_ready(fwd_fn(tokens, params))

    ref = jax.block_until_ready(text_rnn_ref(tokens, params))
    # bf16 streaming of gx / weights / layer outputs -> relaxed tolerance vs
    # the pure-f32 reference (gate accumulation and h/c state stay f32).
    np.testing.assert_allclose(np.asarray(logits), np.asarray(ref),
                               rtol=6e-2, atol=6e-2)

    assert logits.shape == (B, NUM_TAGS)
    print("KERNEL_OK")
</pallas_src>

<mosaic_0001>
module attributes {stable_mosaic.version = 11 : i64} {
  func.func @bilstm_chunk_kernel(%arg0: i32, %arg1: memref<8x2x128xbf16, #tpu.memory_space<vmem>>, %arg2: memref<8x2x128xbf16, #tpu.memory_space<vmem>>, %arg3: memref<32x128xbf16, #tpu.memory_space<vmem>>, %arg4: memref<32x128xbf16, #tpu.memory_space<vmem>>, %arg5: memref<8x2x32xbf16, #tpu.memory_space<vmem>>, %arg6: memref<8x2x32xbf16, #tpu.memory_space<vmem>>, %arg7: memref<2x32xf32, #tpu.memory_space<vmem>>, %arg8: memref<2x32xf32, #tpu.memory_space<vmem>>, %arg9: memref<2x32xf32, #tpu.memory_space<vmem>>, %arg10: memref<2x32xf32, #tpu.memory_space<vmem>>) attributes {dimension_semantics = [#tpu.dimension_semantics<arbitrary>], iteration_bounds = array<i64: 2>, scalar_prefetch = 0 : i64, scratch_operands = 4 : i64, tpu.core_type = #tpu.core_type<tc>, window_params = [{transform_indices = @transform_0, window_bounds = array<i64: 8, 2, 128>}, {transform_indices = @transform_1, window_bounds = array<i64: 8, 2, 128>}, {pipeline_mode = #tpu.pipeline_mode<synchronous>, transform_indices = @transform_2, window_bounds = array<i64: 32, 128>}, {pipeline_mode = #tpu.pipeline_mode<synchronous>, transform_indices = @transform_3, window_bounds = array<i64: 32, 128>}, {transform_indices = @transform_4, window_bounds = array<i64: 8, 2, 32>}, {transform_indices = @transform_5, window_bounds = array<i64: 8, 2, 32>}]} {
    %c0_i32 = arith.constant 0 : i32
    %0 = arith.cmpi eq, %arg0, %c0_i32 : i32
    %1 = arith.extui %0 : i1 to i32
    %c0_i32_0 = arith.constant 0 : i32
    %2 = arith.cmpi ne, %1, %c0_i32_0 : i32
    scf.if %2 {
      %cst_140 = arith.constant 0.000000e+00 : f32
      %549 = vector.broadcast %cst_140 : f32 to vector<2x32xf32>
      %c0_141 = arith.constant 0 : index
      %c0_142 = arith.constant 0 : index
      %550 = vector.load %arg7[%c0_141, %c0_142] : memref<2x32xf32, #tpu.memory_space<vmem>>, vector<2x32xf32>
      tpu.vector_store %arg7[%c0_141, %c0_142], %549 {strides = array<i32>} : memref<2x32xf32, #tpu.memory_space<vmem>>, vector<2x32xf32>,
      %cst_143 = arith.constant 0.000000e+00 : f32
      %551 = vector.broadcast %cst_143 : f32 to vector<2x32xf32>
      %c0_144 = arith.constant 0 : index
      %c0_145 = arith.constant 0 : index
      %552 = vector.load %arg8[%c0_144, %c0_145] : memref<2x32xf32, #tpu.memory_space<vmem>>, vector<2x32xf32>
      tpu.vector_store %arg8[%c0_144, %c0_145], %551 {strides = array<i32>} : memref<2x32xf32, #tpu.memory_space<vmem>>, vector<2x32xf32>,
      %cst_146 = arith.constant 0.000000e+00 : f32
      %553 = vector.broadcast %cst_146 : f32 to vector<2x32xf32>
      %c0_147 = arith.constant 0 : index
      %c0_148 = arith.constant 0 : index
      %554 = vector.load %arg9[%c0_147, %c0_148] : memref<2x32xf32, #tpu.memory_space<vmem>>, vector<2x32xf32>
      tpu.vector_store %arg9[%c0_147, %c0_148], %553 {strides = array<i32>} : memref<2x32xf32, #tpu.memory_space<vmem>>, vector<2x32xf32>,
      %cst_149 = arith.constant 0.000000e+00 : f32
      %555 = vector.broadcast %cst_149 : f32 to vector<2x32xf32>
      %c0_150 = arith.constant 0 : index
      %c0_151 = arith.constant 0 : index
      %556 = vector.load %arg10[%c0_150, %c0_151] : memref<2x32xf32, #tpu.memory_space<vmem>>, vector<2x32xf32>
      tpu.vector_store %arg10[%c0_150, %c0_151], %555 {strides = array<i32>} : memref<2x32xf32, #tpu.memory_space<vmem>>, vector<2x32xf32>,
    } else {
    }
    %c0 = arith.constant 0 : index
    %c0_1 = arith.constant 0 : index
    %3 = vector.load %arg3[%c0, %c0_1] : memref<32x128xbf16, #tpu.memory_space<vmem>>, vector<32x128xbf16>
    %c0_2 = arith.constant 0 : index
    %c0_3 = arith.constant 0 : index
    %4 = vector.load %arg4[%c0_2, %c0_3] : memref<32x128xbf16, #tpu.memory_space<vmem>>, vector<32x128xbf16>
    %c0_4 = arith.constant 0 : index
    %c0_5 = arith.constant 0 : index
    %5 = vector.load %arg7[%c0_4, %c0_5] : memref<2x32xf32, #tpu.memory_space<vmem>>, vector<2x32xf32>
    %c0_6 = arith.constant 0 : index
    %c0_7 = arith.constant 0 : index
    %6 = vector.load %arg8[%c0_6, %c0_7] : memref<2x32xf32, #tpu.memory_space<vmem>>, vector<2x32xf32>
    %c0_8 = arith.constant 0 : index
    %c0_9 = arith.constant 0 : index
    %7 = vector.load %arg9[%c0_8, %c0_9] : memref<2x32xf32, #tpu.memory_space<vmem>>, vector<2x32xf32>
    %c0_10 = arith.constant 0 : index
    %c0_11 = arith.constant 0 : index
    %8 = vector.load %arg10[%c0_10, %c0_11] : memref<2x32xf32, #tpu.memory_space<vmem>>, vector<2x32xf32>
    %c0_i32_12 = arith.constant 0 : i32
    %c7_i32 = arith.constant 7 : i32
    %9 = arith.subi %c7_i32, %c0_i32_12 : i32
    %10 = arith.index_cast %c0_i32_12 : i32 to index
    %c0_13 = arith.constant 0 : index
    %c0_14 = arith.constant 0 : index
    %11 = vector.load %arg1[%10, %c0_13, %c0_14] : memref<8x2x128xbf16, #tpu.memory_space<vmem>>, vector<1x2x128xbf16>
    %12 = vector.shape_cast %11 : vector<1x2x128xbf16> to vector<2x128xbf16>
    %13 = arith.extf %12 : vector<2x128xbf16> to vector<2x128xf32>
    %14 = arith.truncf %5 : vector<2x32xf32> to vector<2x32xbf16>
    %cst = arith.constant dense<0.000000e+00> : vector<2x128xf32>
    %15 = tpu.matmul %14, %3, %cst {dimension_numbers = #tpu.dot_dimension_numbers<[1], [0], [0], [1], [0, 0, 1, 1], [], []>} : vector<2x32xbf16>, vector<32x128xbf16>, vector<2x128xf32> -> vector<2x128xf32>
    %16 = arith.addf %13, %15 : vector<2x128xf32>
    %17 = arith.index_cast %9 : i32 to index
    %c0_15 = arith.constant 0 : index
    %c0_16 = arith.constant 0 : index
    %18 = vector.load %arg2[%17, %c0_15, %c0_16] : memref<8x2x128xbf16, #tpu.memory_space<vmem>>, vector<1x2x128xbf16>
    %19 = vector.shape_cast %18 : vector<1x2x128xbf16> to vector<2x128xbf16>
    %20 = arith.extf %19 : vector<2x128xbf16> to vector<2x128xf32>
    %21 = arith.truncf %7 : vector<2x32xf32> to vector<2x32xbf16>
    %cst_17 = arith.constant dense<0.000000e+00> : vector<2x128xf32>
    %22 = tpu.matmul %21, %4, %cst_17 {dimension_numbers = #tpu.dot_dimension_numbers<[1], [0], [0], [1], [0, 0, 1, 1], [], []>} : vector<2x32xbf16>, vector<32x128xbf16>, vector<2x128xf32> -> vector<2x128xf32>
    %23 = arith.addf %20, %22 : vector<2x128xf32>
    %24 = vector.extract_strided_slice %16 {offsets = [0, 0], sizes = [2, 64], strides = [1, 1]} : vector<2x128xf32> to vector<2x64xf32>
    %25 = arith.negf %24 : vector<2x64xf32>
    %26 = math.exp %25 : vector<2x64xf32>
    %cst_18 = arith.constant 1.000000e+00 : f32
    %27 = vector.broadcast %cst_18 : f32 to vector<2x64xf32>
    %28 = arith.addf %27, %26 : vector<2x64xf32>
    %29 = arith.divf %27, %28 : vector<2x64xf32>
    %30 = vector.extract_strided_slice %29 {offsets = [0, 0], sizes = [2, 32], strides = [1, 1]} : vector<2x64xf32> to vector<2x32xf32>
    %31 = vector.extract_strided_slice %29 {offsets = [0, 32], sizes = [2, 32], strides = [1, 1]} : vector<2x64xf32> to vector<2x32xf32>
    %32 = vector.extract_strided_slice %16 {offsets = [0, 64], sizes = [2, 32], strides = [1, 1]} : vector<2x128xf32> to vector<2x32xf32>
    %33 = math.tanh %32 : vector<2x32xf32>
    %34 = vector.extract_strided_slice %16 {offsets = [0, 96], sizes = [2, 32], strides = [1, 1]} : vector<2x128xf32> to vector<2x32xf32>
    %35 = arith.negf %34 : vector<2x32xf32>
    %36 = math.exp %35 : vector<2x32xf32>
    %cst_19 = arith.constant 1.000000e+00 : f32
    %37 = vector.broadcast %cst_19 : f32 to vector<2x32xf32>
    %38 = arith.addf %37, %36 : vector<2x32xf32>
    %39 = arith.divf %37, %38 : vector<2x32xf32>
    %40 = arith.mulf %31, %6 : vector<2x32xf32>
    %41 = arith.mulf %30, %33 : vector<2x32xf32>
    %42 = arith.addf %40, %41 : vector<2x32xf32>
    %43 = math.tanh %42 : vector<2x32xf32>
    %44 = arith.mulf %39, %43 : vector<2x32xf32>
    %45 = vector.extract_strided_slice %23 {offsets = [0, 0], sizes = [2, 64], strides = [1, 1]} : vector<2x128xf32> to vector<2x64xf32>
    %46 = arith.negf %45 : vector<2x64xf32>
    %47 = math.exp %46 : vector<2x64xf32>
    %cst_20 = arith.constant 1.000000e+00 : f32
    %48 = vector.broadcast %cst_20 : f32 to vector<2x64xf32>
    %49 = arith.addf %48, %47 : vector<2x64xf32>
    %50 = arith.divf %48, %49 : vector<2x64xf32>
    %51 = vector.extract_strided_slice %50 {offsets = [0, 0], sizes = [2, 32], strides = [1, 1]} : vector<2x64xf32> to vector<2x32xf32>
    %52 = vector.extract_strided_slice %50 {offsets = [0, 32], sizes = [2, 32], strides = [1, 1]} : vector<2x64xf32> to vector<2x32xf32>
    %53 = vector.extract_strided_slice %23 {offsets = [0, 64], sizes = [2, 32], strides = [1, 1]} : vector<2x128xf32> to vector<2x32xf32>
    %54 = math.tanh %53 : vector<2x32xf32>
    %55 = vector.extract_strided_slice %23 {offsets = [0, 96], sizes = [2, 32], strides = [1, 1]} : vector<2x128xf32> to vector<2x32xf32>
    %56 = arith.negf %55 : vector<2x32xf32>
    %57 = math.exp %56 : vector<2x32xf32>
    %cst_21 = arith.constant 1.000000e+00 : f32
    %58 = vector.broadcast %cst_21 : f32 to vector<2x32xf32>
    %59 = arith.addf %58, %57 : vector<2x32xf32>
    %60 = arith.divf %58, %59 : vector<2x32xf32>
    %61 = arith.mulf %52, %8 : vector<2x32xf32>
    %62 = arith.mulf %51, %54 : vector<2x32xf32>
    %63 = arith.addf %61, %62 : vector<2x32xf32>
    %64 = math.tanh %63 : vector<2x32xf32>
    %65 = arith.mulf %60, %64 : vector<2x32xf32>
    %66 = arith.truncf %44 : vector<2x32xf32> to vector<2x32xbf16>
    %67 = arith.index_cast %c0_i32_12 : i32 to index
    %c0_22 = arith.constant 0 : index
    %c0_23 = arith.constant 0 : index
    %68 = vector.load %arg5[%67, %c0_22, %c0_23] : memref<8x2x32xbf16, #tpu.memory_space<vmem>>, vector<1x2x32xbf16>
    %69 = vector.shape_cast %68 : vector<1x2x32xbf16> to vector<2x32xbf16>
    %70 = vector.shape_cast %66 : vector<2x32xbf16> to vector<1x2x32xbf16>
    tpu.vector_store %arg5[%67, %c0_22, %c0_23], %70 {strides = array<i32>} : memref<8x2x32xbf16, #tpu.memory_space<vmem>>, vector<1x2x32xbf16>,
    %71 = arith.truncf %65 : vector<2x32xf32> to vector<2x32xbf16>
    %72 = arith.index_cast %9 : i32 to index
    %c0_24 = arith.constant 0 : index
    %c0_25 = arith.constant 0 : index
    %73 = vector.load %arg6[%72, %c0_24, %c0_25] : memref<8x2x32xbf16, #tpu.memory_space<vmem>>, vector<1x2x32xbf16>
    %74 = vector.shape_cast %73 : vector<1x2x32xbf16> to vector<2x32xbf16>
    %75 = vector.shape_cast %71 : vector<2x32xbf16> to vector<1x2x32xbf16>
    tpu.vector_store %arg6[%72, %c0_24, %c0_25], %75 {strides = array<i32>} : memref<8x2x32xbf16, #tpu.memory_space<vmem>>, vector<1x2x32xbf16>,
    %c1_i32 = arith.constant 1 : i32
    %c7_i32_26 = arith.constant 7 : i32
    %76 = arith.subi %c7_i32_26, %c1_i32 : i32
    %77 = arith.index_cast %c1_i32 : i32 to index
    %c0_27 = arith.constant 0 : index
    %c0_28 = arith.constant 0 : index
    %78 = vector.load %arg1[%77, %c0_27, %c0_28] : memref<8x2x128xbf16, #tpu.memory_space<vmem>>, vector<1x2x128xbf16>
    %79 = vector.shape_cast %78 : vector<1x2x128xbf16> to vector<2x128xbf16>
    %80 = arith.extf %79 : vector<2x128xbf16> to vector<2x128xf32>
    %81 = arith.truncf %44 : vector<2x32xf32> to vector<2x32xbf16>
    %cst_29 = arith.constant dense<0.000000e+00> : vector<2x128xf32>
    %82 = tpu.matmul %81, %3, %cst_29 {dimension_numbers = #tpu.dot_dimension_numbers<[1], [0], [0], [1], [0, 0, 1, 1], [], []>} : vector<2x32xbf16>, vector<32x128xbf16>, vector<2x128xf32> -> vector<2x128xf32>
    %83 = arith.addf %80, %82 : vector<2x128xf32>
    %84 = arith.index_cast %76 : i32 to index
    %c0_30 = arith.constant 0 : index
    %c0_31 = arith.constant 0 : index
    %85 = vector.load %arg2[%84, %c0_30, %c0_31] : memref<8x2x128xbf16, #tpu.memory_space<vmem>>, vector<1x2x128xbf16>
    %86 = vector.shape_cast %85 : vector<1x2x128xbf16> to vector<2x128xbf16>
    %87 = arith.extf %86 : vector<2x128xbf16> to vector<2x128xf32>
    %88 = arith.truncf %65 : vector<2x32xf32> to vector<2x32xbf16>
    %cst_32 = arith.constant dense<0.000000e+00> : vector<2x128xf32>
    %89 = tpu.matmul %88, %4, %cst_32 {dimension_numbers = #tpu.dot_dimension_numbers<[1], [0], [0], [1], [0, 0, 1, 1], [], []>} : vector<2x32xbf16>, vector<32x128xbf16>, vector<2x128xf32> -> vector<2x128xf32>
    %90 = arith.addf %87, %89 : vector<2x128xf32>
    %91 = vector.extract_strided_slice %83 {offsets = [0, 0], sizes = [2, 64], strides = [1, 1]} : vector<2x128xf32> to vector<2x64xf32>
    %92 = arith.negf %91 : vector<2x64xf32>
    %93 = math.exp %92 : vector<2x64xf32>
    %cst_33 = arith.constant 1.000000e+00 : f32
    %94 = vector.broadcast %cst_33 : f32 to vector<2x64xf32>
    %95 = arith.addf %94, %93 : vector<2x64xf32>
    %96 = arith.divf %94, %95 : vector<2x64xf32>
    %97 = vector.extract_strided_slice %96 {offsets = [0, 0], sizes = [2, 32], strides = [1, 1]} : vector<2x64xf32> to vector<2x32xf32>
    %98 = vector.extract_strided_slice %96 {offsets = [0, 32], sizes = [2, 32], strides = [1, 1]} : vector<2x64xf32> to vector<2x32xf32>
    %99 = vector.extract_strided_slice %83 {offsets = [0, 64], sizes = [2, 32], strides = [1, 1]} : vector<2x128xf32> to vector<2x32xf32>
    %100 = math.tanh %99 : vector<2x32xf32>
    %101 = vector.extract_strided_slice %83 {offsets = [0, 96], sizes = [2, 32], strides = [1, 1]} : vector<2x128xf32> to vector<2x32xf32>
    %102 = arith.negf %101 : vector<2x32xf32>
    %103 = math.exp %102 : vector<2x32xf32>
    %cst_34 = arith.constant 1.000000e+00 : f32
    %104 = vector.broadcast %cst_34 : f32 to vector<2x32xf32>
    %105 = arith.addf %104, %103 : vector<2x32xf32>
    %106 = arith.divf %104, %105 : vector<2x32xf32>
    %107 = arith.mulf %98, %42 : vector<2x32xf32>
    %108 = arith.mulf %97, %100 : vector<2x32xf32>
    %109 = arith.addf %107, %108 : vector<2x32xf32>
    %110 = math.tanh %109 : vector<2x32xf32>
    %111 = arith.mulf %106, %110 : vector<2x32xf32>
    %112 = vector.extract_strided_slice %90 {offsets = [0, 0], sizes = [2, 64], strides = [1, 1]} : vector<2x128xf32> to vector<2x64xf32>
    %113 = arith.negf %112 : vector<2x64xf32>
    %114 = math.exp %113 : vector<2x64xf32>
    %cst_35 = arith.constant 1.000000e+00 : f32
    %115 = vector.broadcast %cst_35 : f32 to vector<2x64xf32>
    %116 = arith.addf %115, %114 : vector<2x64xf32>
    %117 = arith.divf %115, %116 : vector<2x64xf32>
    %118 = vector.extract_strided_slice %117 {offsets = [0, 0], sizes = [2, 32], strides = [1, 1]} : vector<2x64xf32> to vector<2x32xf32>
    %119 = vector.extract_strided_slice %117 {offsets = [0, 32], sizes = [2, 32], strides = [1, 1]} : vector<2x64xf32> to vector<2x32xf32>
    %120 = vector.extract_strided_slice %90 {offsets = [0, 64], sizes = [2, 32], strides = [1, 1]} : vector<2x128xf32> to vector<2x32xf32>
    %121 = math.tanh %120 : vector<2x32xf32>
    %122 = vector.extract_strided_slice %90 {offsets = [0, 96], sizes = [2, 32], strides = [1, 1]} : vector<2x128xf32> to vector<2x32xf32>
    %123 = arith.negf %122 : vector<2x32xf32>
    %124 = math.exp %123 : vector<2x32xf32>
    %cst_36 = arith.constant 1.000000e+00 : f32
    %125 = vector.broadcast %cst_36 : f32 to vector<2x32xf32>
    %126 = arith.addf %125, %124 : vector<2x32xf32>
    %127 = arith.divf %125, %126 : vector<2x32xf32>
    %128 = arith.mulf %119, %63 : vector<2x32xf32>
    %129 = arith.mulf %118, %121 : vector<2x32xf32>
    %130 = arith.addf %128, %129 : vector<2x32xf32>
    %131 = math.tanh %130 : vector<2x32xf32>
    %132 = arith.mulf %127, %131 : vector<2x32xf32>
    %133 = arith.truncf %111 : vector<2x32xf32> to vector<2x32xbf16>
    %134 = arith.index_cast %c1_i32 : i32 to index
    %c0_37 = arith.constant 0 : index
    %c0_38 = arith.constant 0 : index
    %135 = vector.load %arg5[%134, %c0_37, %c0_38] : memref<8x2x32xbf16, #tpu.memory_space<vmem>>, vector<1x2x32xbf16>
    %136 = vector.shape_cast %135 : vector<1x2x32xbf16> to vector<2x32xbf16>
    %137 = vector.shape_cast %133 : vector<2x32xbf16> to vector<1x2x32xbf16>
    tpu.vector_store %arg5[%134, %c0_37, %c0_38], %137 {strides = array<i32>} : memref<8x2x32xbf16, #tpu.memory_space<vmem>>, vector<1x2x32xbf16>,
    %138 = arith.truncf %132 : vector<2x32xf32> to vector<2x32xbf16>
    %139 = arith.index_cast %76 : i32 to index
    %c0_39 = arith.constant 0 : index
    %c0_40 = arith.constant 0 : index
    %140 = vector.load %arg6[%139, %c0_39, %c0_40] : memref<8x2x32xbf16, #tpu.memory_space<vmem>>, vector<1x2x32xbf16>
    %141 = vector.shape_cast %140 : vector<1x2x32xbf16> to vector<2x32xbf16>
    %142 = vector.shape_cast %138 : vector<2x32xbf16> to vector<1x2x32xbf16>
    tpu.vector_store %arg6[%139, %c0_39, %c0_40], %142 {strides = array<i32>} : memref<8x2x32xbf16, #tpu.memory_space<vmem>>, vector<1x2x32xbf16>,
    %c2_i32 = arith.constant 2 : i32
    %c7_i32_41 = arith.constant 7 : i32
    %143 = arith.subi %c7_i32_41, %c2_i32 : i32
    %144 = arith.index_cast %c2_i32 : i32 to index
    %c0_42 = arith.constant 0 : index
    %c0_43 = arith.constant 0 : index
    %145 = vector.load %arg1[%144, %c0_42, %c0_43] : memref<8x2x128xbf16, #tpu.memory_space<vmem>>, vector<1x2x128xbf16>
    %146 = vector.shape_cast %145 : vector<1x2x128xbf16> to vector<2x128xbf16>
    %147 = arith.extf %146 : vector<2x128xbf16> to vector<2x128xf32>
    %148 = arith.truncf %111 : vector<2x32xf32> to vector<2x32xbf16>
    %cst_44 = arith.constant dense<0.000000e+00> : vector<2x128xf32>
    %149 = tpu.matmul %148, %3, %cst_44 {dimension_numbers = #tpu.dot_dimension_numbers<[1], [0], [0], [1], [0, 0, 1, 1], [], []>} : vector<2x32xbf16>, vector<32x128xbf16>, vector<2x128xf32> -> vector<2x128xf32>
    %150 = arith.addf %147, %149 : vector<2x128xf32>
    %151 = arith.index_cast %143 : i32 to index
    %c0_45 = arith.constant 0 : index
    %c0_46 = arith.constant 0 : index
    %152 = vector.load %arg2[%151, %c0_45, %c0_46] : memref<8x2x128xbf16, #tpu.memory_space<vmem>>, vector<1x2x128xbf16>
    %153 = vector.shape_cast %152 : vector<1x2x128xbf16> to vector<2x128xbf16>
    %154 = arith.extf %153 : vector<2x128xbf16> to vector<2x128xf32>
    %155 = arith.truncf %132 : vector<2x32xf32> to vector<2x32xbf16>
    %cst_47 = arith.constant dense<0.000000e+00> : vector<2x128xf32>
    %156 = tpu.matmul %155, %4, %cst_47 {dimension_numbers = #tpu.dot_dimension_numbers<[1], [0], [0], [1], [0, 0, 1, 1], [], []>} : vector<2x32xbf16>, vector<32x128xbf16>, vector<2x128xf32> -> vector<2x128xf32>
    %157 = arith.addf %154, %156 : vector<2x128xf32>
    %158 = vector.extract_strided_slice %150 {offsets = [0, 0], sizes = [2, 64], strides = [1, 1]} : vector<2x128xf32> to vector<2x64xf32>
    %159 = arith.negf %158 : vector<2x64xf32>
    %160 = math.exp %159 : vector<2x64xf32>
    %cst_48 = arith.constant 1.000000e+00 : f32
    %161 = vector.broadcast %cst_48 : f32 to vector<2x64xf32>
    %162 = arith.addf %161, %160 : vector<2x64xf32>
    %163 = arith.divf %161, %162 : vector<2x64xf32>
    %164 = vector.extract_strided_slice %163 {offsets = [0, 0], sizes = [2, 32], strides = [1, 1]} : vector<2x64xf32> to vector<2x32xf32>
    %165 = vector.extract_strided_slice %163 {offsets = [0, 32], sizes = [2, 32], strides = [1, 1]} : vector<2x64xf32> to vector<2x32xf32>
    %166 = vector.extract_strided_slice %150 {offsets = [0, 64], sizes = [2, 32], strides = [1, 1]} : vector<2x128xf32> to vector<2x32xf32>
    %167 = math.tanh %166 : vector<2x32xf32>
    %168 = vector.extract_strided_slice %150 {offsets = [0, 96], sizes = [2, 32], strides = [1, 1]} : vector<2x128xf32> to vector<2x32xf32>
    %169 = arith.negf %168 : vector<2x32xf32>
    %170 = math.exp %169 : vector<2x32xf32>
    %cst_49 = arith.constant 1.000000e+00 : f32
    %171 = vector.broadcast %cst_49 : f32 to vector<2x32xf32>
    %172 = arith.addf %171, %170 : vector<2x32xf32>
    %173 = arith.divf %171, %172 : vector<2x32xf32>
    %174 = arith.mulf %165, %109 : vector<2x32xf32>
    %175 = arith.mulf %164, %167 : vector<2x32xf32>
    %176 = arith.addf %174, %175 : vector<2x32xf32>
    %177 = math.tanh %176 : vector<2x32xf32>
    %178 = arith.mulf %173, %177 : vector<2x32xf32>
    %179 = vector.extract_strided_slice %157 {offsets = [0, 0], sizes = [2, 64], strides = [1, 1]} : vector<2x128xf32> to vector<2x64xf32>
    %180 = arith.negf %179 : vector<2x64xf32>
    %181 = math.exp %180 : vector<2x64xf32>
    %cst_50 = arith.constant 1.000000e+00 : f32
    %182 = vector.broadcast %cst_50 : f32 to vector<2x64xf32>
    %183 = arith.addf %182, %181 : vector<2x64xf32>
    %184 = arith.divf %182, %183 : vector<2x64xf32>
    %185 = vector.extract_strided_slice %184 {offsets = [0, 0], sizes = [2, 32], strides = [1, 1]} : vector<2x64xf32> to vector<2x32xf32>
    %186 = vector.extract_strided_slice %184 {offsets = [0, 32], sizes = [2, 32], strides = [1, 1]} : vector<2x64xf32> to vector<2x32xf32>
    %187 = vector.extract_strided_slice %157 {offsets = [0, 64], sizes = [2, 32], strides = [1, 1]} : vector<2x128xf32> to vector<2x32xf32>
    %188 = math.tanh %187 : vector<2x32xf32>
    %189 = vector.extract_strided_slice %157 {offsets = [0, 96], sizes = [2, 32], strides = [1, 1]} : vector<2x128xf32> to vector<2x32xf32>
    %190 = arith.negf %189 : vector<2x32xf32>
    %191 = math.exp %190 : vector<2x32xf32>
    %cst_51 = arith.constant 1.000000e+00 : f32
    %192 = vector.broadcast %cst_51 : f32 to vector<2x32xf32>
    %193 = arith.addf %192, %191 : vector<2x32xf32>
    %194 = arith.divf %192, %193 : vector<2x32xf32>
    %195 = arith.mulf %186, %130 : vector<2x32xf32>
    %196 = arith.mulf %185, %188 : vector<2x32xf32>
    %197 = arith.addf %195, %196 : vector<2x32xf32>
    %198 = math.tanh %197 : vector<2x32xf32>
    %199 = arith.mulf %194, %198 : vector<2x32xf32>
    %200 = arith.truncf %178 : vector<2x32xf32> to vector<2x32xbf16>
    %201 = arith.index_cast %c2_i32 : i32 to index
    %c0_52 = arith.constant 0 : index
    %c0_53 = arith.constant 0 : index
    %202 = vector.load %arg5[%201, %c0_52, %c0_53] : memref<8x2x32xbf16, #tpu.memory_space<vmem>>, vector<1x2x32xbf16>
    %203 = vector.shape_cast %202 : vector<1x2x32xbf16> to vector<2x32xbf16>
    %204 = vector.shape_cast %200 : vector<2x32xbf16> to vector<1x2x32xbf16>
    tpu.vector_store %arg5[%201, %c0_52, %c0_53], %204 {strides = array<i32>} : memref<8x2x32xbf16, #tpu.memory_space<vmem>>, vector<1x2x32xbf16>,
    %205 = arith.truncf %199 : vector<2x32xf32> to vector<2x32xbf16>
    %206 = arith.index_cast %143 : i32 to index
    %c0_54 = arith.constant 0 : index
    %c0_55 = arith.constant 0 : index
    %207 = vector.load %arg6[%206, %c0_54, %c0_55] : memref<8x2x32xbf16, #tpu.memory_space<vmem>>, vector<1x2x32xbf16>
    %208 = vector.shape_cast %207 : vector<1x2x32xbf16> to vector<2x32xbf16>
    %209 = vector.shape_cast %205 : vector<2x32xbf16> to vector<1x2x32xbf16>
    tpu.vector_store %arg6[%206, %c0_54, %c0_55], %209 {strides = array<i32>} : memref<8x2x32xbf16, #tpu.memory_space<vmem>>, vector<1x2x32xbf16>,
    %c3_i32 = arith.constant 3 : i32
    %c7_i32_56 = arith.constant 7 : i32
    %210 = arith.subi %c7_i32_56, %c3_i32 : i32
    %211 = arith.index_cast %c3_i32 : i32 to index
    %c0_57 = arith.constant 0 : index
    %c0_58 = arith.constant 0 : index
    %212 = vector.load %arg1[%211, %c0_57, %c0_58] : memref<8x2x128xbf16, #tpu.memory_space<vmem>>, vector<1x2x128xbf16>
    %213 = vector.shape_cast %212 : vector<1x2x128xbf16> to vector<2x128xbf16>
    %214 = arith.extf %213 : vector<2x128xbf16> to vector<2x128xf32>
    %215 = arith.truncf %178 : vector<2x32xf32> to vector<2x32xbf16>
    %cst_59 = arith.constant dense<0.000000e+00> : vector<2x128xf32>
    %216 = tpu.matmul %215, %3, %cst_59 {dimension_numbers = #tpu.dot_dimension_numbers<[1], [0], [0], [1], [0, 0, 1, 1], [], []>} : vector<2x32xbf16>, vector<32x128xbf16>, vector<2x128xf32> -> vector<2x128xf32>
    %217 = arith.addf %214, %216 : vector<2x128xf32>
    %218 = arith.index_cast %210 : i32 to index
    %c0_60 = arith.constant 0 : index
    %c0_61 = arith.constant 0 : index
    %219 = vector.load %arg2[%218, %c0_60, %c0_61] : memref<8x2x128xbf16, #tpu.memory_space<vmem>>, vector<1x2x128xbf16>
    %220 = vector.shape_cast %219 : vector<1x2x128xbf16> to vector<2x128xbf16>
    %221 = arith.extf %220 : vector<2x128xbf16> to vector<2x128xf32>
    %222 = arith.truncf %199 : vector<2x32xf32> to vector<2x32xbf16>
    %cst_62 = arith.constant dense<0.000000e+00> : vector<2x128xf32>
    %223 = tpu.matmul %222, %4, %cst_62 {dimension_numbers = #tpu.dot_dimension_numbers<[1], [0], [0], [1], [0, 0, 1, 1], [], []>} : vector<2x32xbf16>, vector<32x128xbf16>, vector<2x128xf32> -> vector<2x128xf32>
    %224 = arith.addf %221, %223 : vector<2x128xf32>
    %225 = vector.extract_strided_slice %217 {offsets = [0, 0], sizes = [2, 64], strides = [1, 1]} : vector<2x128xf32> to vector<2x64xf32>
    %226 = arith.negf %225 : vector<2x64xf32>
    %227 = math.exp %226 : vector<2x64xf32>
    %cst_63 = arith.constant 1.000000e+00 : f32
    %228 = vector.broadcast %cst_63 : f32 to vector<2x64xf32>
    %229 = arith.addf %228, %227 : vector<2x64xf32>
    %230 = arith.divf %228, %229 : vector<2x64xf32>
    %231 = vector.extract_strided_slice %230 {offsets = [0, 0], sizes = [2, 32], strides = [1, 1]} : vector<2x64xf32> to vector<2x32xf32>
    %232 = vector.extract_strided_slice %230 {offsets = [0, 32], sizes = [2, 32], strides = [1, 1]} : vector<2x64xf32> to vector<2x32xf32>
    %233 = vector.extract_strided_slice %217 {offsets = [0, 64], sizes = [2, 32], strides = [1, 1]} : vector<2x128xf32> to vector<2x32xf32>
    %234 = math.tanh %233 : vector<2x32xf32>
    %235 = vector.extract_strided_slice %217 {offsets = [0, 96], sizes = [2, 32], strides = [1, 1]} : vector<2x128xf32> to vector<2x32xf32>
    %236 = arith.negf %235 : vector<2x32xf32>
    %237 = math.exp %236 : vector<2x32xf32>
    %cst_64 = arith.constant 1.000000e+00 : f32
    %238 = vector.broadcast %cst_64 : f32 to vector<2x32xf32>
    %239 = arith.addf %238, %237 : vector<2x32xf32>
    %240 = arith.divf %238, %239 : vector<2x32xf32>
    %241 = arith.mulf %232, %176 : vector<2x32xf32>
    %242 = arith.mulf %231, %234 : vector<2x32xf32>
    %243 = arith.addf %241, %242 : vector<2x32xf32>
    %244 = math.tanh %243 : vector<2x32xf32>
    %245 = arith.mulf %240, %244 : vector<2x32xf32>
    %246 = vector.extract_strided_slice %224 {offsets = [0, 0], sizes = [2, 64], strides = [1, 1]} : vector<2x128xf32> to vector<2x64xf32>
    %247 = arith.negf %246 : vector<2x64xf32>
    %248 = math.exp %247 : vector<2x64xf32>
    %cst_65 = arith.constant 1.000000e+00 : f32
    %249 = vector.broadcast %cst_65 : f32 to vector<2x64xf32>
    %250 = arith.addf %249, %248 : vector<2x64xf32>
    %251 = arith.divf %249, %250 : vector<2x64xf32>
    %252 = vector.extract_strided_slice %251 {offsets = [0, 0], sizes = [2, 32], strides = [1, 1]} : vector<2x64xf32> to vector<2x32xf32>
    %253 = vector.extract_strided_slice %251 {offsets = [0, 32], sizes = [2, 32], strides = [1, 1]} : vector<2x64xf32> to vector<2x32xf32>
    %254 = vector.extract_strided_slice %224 {offsets = [0, 64], sizes = [2, 32], strides = [1, 1]} : vector<2x128xf32> to vector<2x32xf32>
    %255 = math.tanh %254 : vector<2x32xf32>
    %256 = vector.extract_strided_slice %224 {offsets = [0, 96], sizes = [2, 32], strides = [1, 1]} : vector<2x128xf32> to vector<2x32xf32>
    %257 = arith.negf %256 : vector<2x32xf32>
    %258 = math.exp %257 : vector<2x32xf32>
    %cst_66 = arith.constant 1.000000e+00 : f32
    %259 = vector.broadcast %cst_66 : f32 to vector<2x32xf32>
    %260 = arith.addf %259, %258 : vector<2x32xf32>
    %261 = arith.divf %259, %260 : vector<2x32xf32>
    %262 = arith.mulf %253, %197 : vector<2x32xf32>
    %263 = arith.mulf %252, %255 : vector<2x32xf32>
    %264 = arith.addf %262, %263 : vector<2x32xf32>
    %265 = math.tanh %264 : vector<2x32xf32>
    %266 = arith.mulf %261, %265 : vector<2x32xf32>
    %267 = arith.truncf %245 : vector<2x32xf32> to vector<2x32xbf16>
    %268 = arith.index_cast %c3_i32 : i32 to index
    %c0_67 = arith.constant 0 : index
    %c0_68 = arith.constant 0 : index
    %269 = vector.load %arg5[%268, %c0_67, %c0_68] : memref<8x2x32xbf16, #tpu.memory_space<vmem>>, vector<1x2x32xbf16>
    %270 = vector.shape_cast %269 : vector<1x2x32xbf16> to vector<2x32xbf16>
    %271 = vector.shape_cast %267 : vector<2x32xbf16> to vector<1x2x32xbf16>
    tpu.vector_store %arg5[%268, %c0_67, %c0_68], %271 {strides = array<i32>} : memref<8x2x32xbf16, #tpu.memory_space<vmem>>, vector<1x2x32xbf16>,
    %272 = arith.truncf %266 : vector<2x32xf32> to vector<2x32xbf16>
    %273 = arith.index_cast %210 : i32 to index
    %c0_69 = arith.constant 0 : index
    %c0_70 = arith.constant 0 : index
    %274 = vector.load %arg6[%273, %c0_69, %c0_70] : memref<8x2x32xbf16, #tpu.memory_space<vmem>>, vector<1x2x32xbf16>
    %275 = vector.shape_cast %274 : vector<1x2x32xbf16> to vector<2x32xbf16>
    %276 = vector.shape_cast %272 : vector<2x32xbf16> to vector<1x2x32xbf16>
    tpu.vector_store %arg6[%273, %c0_69, %c0_70], %276 {strides = array<i32>} : memref<8x2x32xbf16, #tpu.memory_space<vmem>>, vector<1x2x32xbf16>,
    %c4_i32 = arith.constant 4 : i32
    %c7_i32_71 = arith.constant 7 : i32
    %277 = arith.subi %c7_i32_71, %c4_i32 : i32
    %278 = arith.index_cast %c4_i32 : i32 to index
    %c0_72 = arith.constant 0 : index
    %c0_73 = arith.constant 0 : index
    %279 = vector.load %arg1[%278, %c0_72, %c0_73] : memref<8x2x128xbf16, #tpu.memory_space<vmem>>, vector<1x2x128xbf16>
    %280 = vector.shape_cast %279 : vector<1x2x128xbf16> to vector<2x128xbf16>
    %281 = arith.extf %280 : vector<2x128xbf16> to vector<2x128xf32>
    %282 = arith.truncf %245 : vector<2x32xf32> to vector<2x32xbf16>
    %cst_74 = arith.constant dense<0.000000e+00> : vector<2x128xf32>
    %283 = tpu.matmul %282, %3, %cst_74 {dimension_numbers = #tpu.dot_dimension_numbers<[1], [0], [0], [1], [0, 0, 1, 1], [], []>} : vector<2x32xbf16>, vector<32x128xbf16>, vector<2x128xf32> -> vector<2x128xf32>
    %284 = arith.addf %281, %283 : vector<2x128xf32>
    %285 = arith.index_cast %277 : i32 to index
    %c0_75 = arith.constant 0 : index
    %c0_76 = arith.constant 0 : index
    %286 = vector.load %arg2[%285, %c0_75, %c0_76] : memref<8x2x128xbf16, #tpu.memory_space<vmem>>, vector<1x2x128xbf16>
    %287 = vector.shape_cast %286 : vector<1x2x128xbf16> to vector<2x128xbf16>
    %288 = arith.extf %287 : vector<2x128xbf16> to vector<2x128xf32>
    %289 = arith.truncf %266 : vector<2x32xf32> to vector<2x32xbf16>
    %cst_77 = arith.constant dense<0.000000e+00> : vector<2x128xf32>
    %290 = tpu.matmul %289, %4, %cst_77 {dimension_numbers = #tpu.dot_dimension_numbers<[1], [0], [0], [1], [0, 0, 1, 1], [], []>} : vector<2x32xbf16>, vector<32x128xbf16>, vector<2x128xf32> -> vector<2x128xf32>
    %291 = arith.addf %288, %290 : vector<2x128xf32>
    %292 = vector.extract_strided_slice %284 {offsets = [0, 0], sizes = [2, 64], strides = [1, 1]} : vector<2x128xf32> to vector<2x64xf32>
    %293 = arith.negf %292 : vector<2x64xf32>
    %294 = math.exp %293 : vector<2x64xf32>
    %cst_78 = arith.constant 1.000000e+00 : f32
    %295 = vector.broadcast %cst_78 : f32 to vector<2x64xf32>
    %296 = arith.addf %295, %294 : vector<2x64xf32>
    %297 = arith.divf %295, %296 : vector<2x64xf32>
    %298 = vector.extract_strided_slice %297 {offsets = [0, 0], sizes = [2, 32], strides = [1, 1]} : vector<2x64xf32> to vector<2x32xf32>
    %299 = vector.extract_strided_slice %297 {offsets = [0, 32], sizes = [2, 32], strides = [1, 1]} : vector<2x64xf32> to vector<2x32xf32>
    %300 = vector.extract_strided_slice %284 {offsets = [0, 64], sizes = [2, 32], strides = [1, 1]} : vector<2x128xf32> to vector<2x32xf32>
    %301 = math.tanh %300 : vector<2x32xf32>
    %302 = vector.extract_strided_slice %284 {offsets = [0, 96], sizes = [2, 32], strides = [1, 1]} : vector<2x128xf32> to vector<2x32xf32>
    %303 = arith.negf %302 : vector<2x32xf32>
    %304 = math.exp %303 : vector<2x32xf32>
    %cst_79 = arith.constant 1.000000e+00 : f32
    %305 = vector.broadcast %cst_79 : f32 to vector<2x32xf32>
    %306 = arith.addf %305, %304 : vector<2x32xf32>
    %307 = arith.divf %305, %306 : vector<2x32xf32>
    %308 = arith.mulf %299, %243 : vector<2x32xf32>
    %309 = arith.mulf %298, %301 : vector<2x32xf32>
    %310 = arith.addf %308, %309 : vector<2x32xf32>
    %311 = math.tanh %310 : vector<2x32xf32>
    %312 = arith.mulf %307, %311 : vector<2x32xf32>
    %313 = vector.extract_strided_slice %291 {offsets = [0, 0], sizes = [2, 64], strides = [1, 1]} : vector<2x128xf32> to vector<2x64xf32>
    %314 = arith.negf %313 : vector<2x64xf32>
    %315 = math.exp %314 : vector<2x64xf32>
    %cst_80 = arith.constant 1.000000e+00 : f32
    %316 = vector.broadcast %cst_80 : f32 to vector<2x64xf32>
    %317 = arith.addf %316, %315 : vector<2x64xf32>
    %318 = arith.divf %316, %317 : vector<2x64xf32>
    %319 = vector.extract_strided_slice %318 {offsets = [0, 0], sizes = [2, 32], strides = [1, 1]} : vector<2x64xf32> to vector<2x32xf32>
    %320 = vector.extract_strided_slice %318 {offsets = [0, 32], sizes = [2, 32], strides = [1, 1]} : vector<2x64xf32> to vector<2x32xf32>
    %321 = vector.extract_strided_slice %291 {offsets = [0, 64], sizes = [2, 32], strides = [1, 1]} : vector<2x128xf32> to vector<2x32xf32>
    %322 = math.tanh %321 : vector<2x32xf32>
    %323 = vector.extract_strided_slice %291 {offsets = [0, 96], sizes = [2, 32], strides = [1, 1]} : vector<2x128xf32> to vector<2x32xf32>
    %324 = arith.negf %323 : vector<2x32xf32>
    %325 = math.exp %324 : vector<2x32xf32>
    %cst_81 = arith.constant 1.000000e+00 : f32
    %326 = vector.broadcast %cst_81 : f32 to vector<2x32xf32>
    %327 = arith.addf %326, %325 : vector<2x32xf32>
    %328 = arith.divf %326, %327 : vector<2x32xf32>
    %329 = arith.mulf %320, %264 : vector<2x32xf32>
    %330 = arith.mulf %319, %322 : vector<2x32xf32>
    %331 = arith.addf %329, %330 : vector<2x32xf32>
    %332 = math.tanh %331 : vector<2x32xf32>
    %333 = arith.mulf %328, %332 : vector<2x32xf32>
    %334 = arith.truncf %312 : vector<2x32xf32> to vector<2x32xbf16>
    %335 = arith.index_cast %c4_i32 : i32 to index
    %c0_82 = arith.constant 0 : index
    %c0_83 = arith.constant 0 : index
    %336 = vector.load %arg5[%335, %c0_82, %c0_83] : memref<8x2x32xbf16, #tpu.memory_space<vmem>>, vector<1x2x32xbf16>
    %337 = vector.shape_cast %336 : vector<1x2x32xbf16> to vector<2x32xbf16>
    %338 = vector.shape_cast %334 : vector<2x32xbf16> to vector<1x2x32xbf16>
    tpu.vector_store %arg5[%335, %c0_82, %c0_83], %338 {strides = array<i32>} : memref<8x2x32xbf16, #tpu.memory_space<vmem>>, vector<1x2x32xbf16>,
    %339 = arith.truncf %333 : vector<2x32xf32> to vector<2x32xbf16>
    %340 = arith.index_cast %277 : i32 to index
    %c0_84 = arith.constant 0 : index
    %c0_85 = arith.constant 0 : index
    %341 = vector.load %arg6[%340, %c0_84, %c0_85] : memref<8x2x32xbf16, #tpu.memory_space<vmem>>, vector<1x2x32xbf16>
    %342 = vector.shape_cast %341 : vector<1x2x32xbf16> to vector<2x32xbf16>
    %343 = vector.shape_cast %339 : vector<2x32xbf16> to vector<1x2x32xbf16>
    tpu.vector_store %arg6[%340, %c0_84, %c0_85], %343 {strides = array<i32>} : memref<8x2x32xbf16, #tpu.memory_space<vmem>>, vector<1x2x32xbf16>,
    %c5_i32 = arith.constant 5 : i32
    %c7_i32_86 = arith.constant 7 : i32
    %344 = arith.subi %c7_i32_86, %c5_i32 : i32
    %345 = arith.index_cast %c5_i32 : i32 to index
    %c0_87 = arith.constant 0 : index
    %c0_88 = arith.constant 0 : index
    %346 = vector.load %arg1[%345, %c0_87, %c0_88] : memref<8x2x128xbf16, #tpu.memory_space<vmem>>, vector<1x2x128xbf16>
    %347 = vector.shape_cast %346 : vector<1x2x128xbf16> to vector<2x128xbf16>
    %348 = arith.extf %347 : vector<2x128xbf16> to vector<2x128xf32>
    %349 = arith.truncf %312 : vector<2x32xf32> to vector<2x32xbf16>
    %cst_89 = arith.constant dense<0.000000e+00> : vector<2x128xf32>
    %350 = tpu.matmul %349, %3, %cst_89 {dimension_numbers = #tpu.dot_dimension_numbers<[1], [0], [0], [1], [0, 0, 1, 1], [], []>} : vector<2x32xbf16>, vector<32x128xbf16>, vector<2x128xf32> -> vector<2x128xf32>
    %351 = arith.addf %348, %350 : vector<2x128xf32>
    %352 = arith.index_cast %344 : i32 to index
    %c0_90 = arith.constant 0 : index
    %c0_91 = arith.constant 0 : index
    %353 = vector.load %arg2[%352, %c0_90, %c0_91] : memref<8x2x128xbf16, #tpu.memory_space<vmem>>, vector<1x2x128xbf16>
    %354 = vector.shape_cast %353 : vector<1x2x128xbf16> to vector<2x128xbf16>
    %355 = arith.extf %354 : vector<2x128xbf16> to vector<2x128xf32>
    %356 = arith.truncf %333 : vector<2x32xf32> to vector<2x32xbf16>
    %cst_92 = arith.constant dense<0.000000e+00> : vector<2x128xf32>
    %357 = tpu.matmul %356, %4, %cst_92 {dimension_numbers = #tpu.dot_dimension_numbers<[1], [0], [0], [1], [0, 0, 1, 1], [], []>} : vector<2x32xbf16>, vector<32x128xbf16>, vector<2x128xf32> -> vector<2x128xf32>
    %358 = arith.addf %355, %357 : vector<2x128xf32>
    %359 = vector.extract_strided_slice %351 {offsets = [0, 0], sizes = [2, 64], strides = [1, 1]} : vector<2x128xf32> to vector<2x64xf32>
    %360 = arith.negf %359 : vector<2x64xf32>
    %361 = math.exp %360 : vector<2x64xf32>
    %cst_93 = arith.constant 1.000000e+00 : f32
    %362 = vector.broadcast %cst_93 : f32 to vector<2x64xf32>
    %363 = arith.addf %362, %361 : vector<2x64xf32>
    %364 = arith.divf %362, %363 : vector<2x64xf32>
    %365 = vector.extract_strided_slice %364 {offsets = [0, 0], sizes = [2, 32], strides = [1, 1]} : vector<2x64xf32> to vector<2x32xf32>
    %366 = vector.extract_strided_slice %364 {offsets = [0, 32], sizes = [2, 32], strides = [1, 1]} : vector<2x64xf32> to vector<2x32xf32>
    %367 = vector.extract_strided_slice %351 {offsets = [0, 64], sizes = [2, 32], strides = [1, 1]} : vector<2x128xf32> to vector<2x32xf32>
    %368 = math.tanh %367 : vector<2x32xf32>
    %369 = vector.extract_strided_slice %351 {offsets = [0, 96], sizes = [2, 32], strides = [1, 1]} : vector<2x128xf32> to vector<2x32xf32>
    %370 = arith.negf %369 : vector<2x32xf32>
    %371 = math.exp %370 : vector<2x32xf32>
    %cst_94 = arith.constant 1.000000e+00 : f32
    %372 = vector.broadcast %cst_94 : f32 to vector<2x32xf32>
    %373 = arith.addf %372, %371 : vector<2x32xf32>
    %374 = arith.divf %372, %373 : vector<2x32xf32>
    %375 = arith.mulf %366, %310 : vector<2x32xf32>
    %376 = arith.mulf %365, %368 : vector<2x32xf32>
    %377 = arith.addf %375, %376 : vector<2x32xf32>
    %378 = math.tanh %377 : vector<2x32xf32>
    %379 = arith.mulf %374, %378 : vector<2x32xf32>
    %380 = vector.extract_strided_slice %358 {offsets = [0, 0], sizes = [2, 64], strides = [1, 1]} : vector<2x128xf32> to vector<2x64xf32>
    %381 = arith.negf %380 : vector<2x64xf32>
    %382 = math.exp %381 : vector<2x64xf32>
    %cst_95 = arith.constant 1.000000e+00 : f32
    %383 = vector.broadcast %cst_95 : f32 to vector<2x64xf32>
    %384 = arith.addf %383, %382 : vector<2x64xf32>
    %385 = arith.divf %383, %384 : vector<2x64xf32>
    %386 = vector.extract_strided_slice %385 {offsets = [0, 0], sizes = [2, 32], strides = [1, 1]} : vector<2x64xf32> to vector<2x32xf32>
    %387 = vector.extract_strided_slice %385 {offsets = [0, 32], sizes = [2, 32], strides = [1, 1]} : vector<2x64xf32> to vector<2x32xf32>
    %388 = vector.extract_strided_slice %358 {offsets = [0, 64], sizes = [2, 32], strides = [1, 1]} : vector<2x128xf32> to vector<2x32xf32>
    %389 = math.tanh %388 : vector<2x32xf32>
    %390 = vector.extract_strided_slice %358 {offsets = [0, 96], sizes = [2, 32], strides = [1, 1]} : vector<2x128xf32> to vector<2x32xf32>
    %391 = arith.negf %390 : vector<2x32xf32>
    %392 = math.exp %391 : vector<2x32xf32>
    %cst_96 = arith.constant 1.000000e+00 : f32
    %393 = vector.broadcast %cst_96 : f32 to vector<2x32xf32>
    %394 = arith.addf %393, %392 : vector<2x32xf32>
    %395 = arith.divf %393, %394 : vector<2x32xf32>
    %396 = arith.mulf %387, %331 : vector<2x32xf32>
    %397 = arith.mulf %386, %389 : vector<2x32xf32>
    %398 = arith.addf %396, %397 : vector<2x32xf32>
    %399 = math.tanh %398 : vector<2x32xf32>
    %400 = arith.mulf %395, %399 : vector<2x32xf32>
    %401 = arith.truncf %379 : vector<2x32xf32> to vector<2x32xbf16>
    %402 = arith.index_cast %c5_i32 : i32 to index
    %c0_97 = arith.constant 0 : index
    %c0_98 = arith.constant 0 : index
    %403 = vector.load %arg5[%402, %c0_97, %c0_98] : memref<8x2x32xbf16, #tpu.memory_space<vmem>>, vector<1x2x32xbf16>
    %404 = vector.shape_cast %403 : vector<1x2x32xbf16> to vector<2x32xbf16>
    %405 = vector.shape_cast %401 : vector<2x32xbf16> to vector<1x2x32xbf16>
    tpu.vector_store %arg5[%402, %c0_97, %c0_98], %405 {strides = array<i32>} : memref<8x2x32xbf16, #tpu.memory_space<vmem>>, vector<1x2x32xbf16>,
    %406 = arith.truncf %400 : vector<2x32xf32> to vector<2x32xbf16>
    %407 = arith.index_cast %344 : i32 to index
    %c0_99 = arith.constant 0 : index
    %c0_100 = arith.constant 0 : index
    %408 = vector.load %arg6[%407, %c0_99, %c0_100] : memref<8x2x32xbf16, #tpu.memory_space<vmem>>, vector<1x2x32xbf16>
    %409 = vector.shape_cast %408 : vector<1x2x32xbf16> to vector<2x32xbf16>
    %410 = vector.shape_cast %406 : vector<2x32xbf16> to vector<1x2x32xbf16>
    tpu.vector_store %arg6[%407, %c0_99, %c0_100], %410 {strides = array<i32>} : memref<8x2x32xbf16, #tpu.memory_space<vmem>>, vector<1x2x32xbf16>,
    %c6_i32 = arith.constant 6 : i32
    %c7_i32_101 = arith.constant 7 : i32
    %411 = arith.subi %c7_i32_101, %c6_i32 : i32
    %412 = arith.index_cast %c6_i32 : i32 to index
    %c0_102 = arith.constant 0 : index
    %c0_103 = arith.constant 0 : index
    %413 = vector.load %arg1[%412, %c0_102, %c0_103] : memref<8x2x128xbf16, #tpu.memory_space<vmem>>, vector<1x2x128xbf16>
    %414 = vector.shape_cast %413 : vector<1x2x128xbf16> to vector<2x128xbf16>
    %415 = arith.extf %414 : vector<2x128xbf16> to vector<2x128xf32>
    %416 = arith.truncf %379 : vector<2x32xf32> to vector<2x32xbf16>
    %cst_104 = arith.constant dense<0.000000e+00> : vector<2x128xf32>
    %417 = tpu.matmul %416, %3, %cst_104 {dimension_numbers = #tpu.dot_dimension_numbers<[1], [0], [0], [1], [0, 0, 1, 1], [], []>} : vector<2x32xbf16>, vector<32x128xbf16>, vector<2x128xf32> -> vector<2x128xf32>
    %418 = arith.addf %415, %417 : vector<2x128xf32>
    %419 = arith.index_cast %411 : i32 to index
    %c0_105 = arith.constant 0 : index
    %c0_106 = arith.constant 0 : index
    %420 = vector.load %arg2[%419, %c0_105, %c0_106] : memref<8x2x128xbf16, #tpu.memory_space<vmem>>, vector<1x2x128xbf16>
    %421 = vector.shape_cast %420 : vector<1x2x128xbf16> to vector<2x128xbf16>
    %422 = arith.extf %421 : vector<2x128xbf16> to vector<2x128xf32>
    %423 = arith.truncf %400 : vector<2x32xf32> to vector<2x32xbf16>
    %cst_107 = arith.constant dense<0.000000e+00> : vector<2x128xf32>
    %424 = tpu.matmul %423, %4, %cst_107 {dimension_numbers = #tpu.dot_dimension_numbers<[1], [0], [0], [1], [0, 0, 1, 1], [], []>} : vector<2x32xbf16>, vector<32x128xbf16>, vector<2x128xf32> -> vector<2x128xf32>
    %425 = arith.addf %422, %424 : vector<2x128xf32>
    %426 = vector.extract_strided_slice %418 {offsets = [0, 0], sizes = [2, 64], strides = [1, 1]} : vector<2x128xf32> to vector<2x64xf32>
    %427 = arith.negf %426 : vector<2x64xf32>
    %428 = math.exp %427 : vector<2x64xf32>
    %cst_108 = arith.constant 1.000000e+00 : f32
    %429 = vector.broadcast %cst_108 : f32 to vector<2x64xf32>
    %430 = arith.addf %429, %428 : vector<2x64xf32>
    %431 = arith.divf %429, %430 : vector<2x64xf32>
    %432 = vector.extract_strided_slice %431 {offsets = [0, 0], sizes = [2, 32], strides = [1, 1]} : vector<2x64xf32> to vector<2x32xf32>
    %433 = vector.extract_strided_slice %431 {offsets = [0, 32], sizes = [2, 32], strides = [1, 1]} : vector<2x64xf32> to vector<2x32xf32>
    %434 = vector.extract_strided_slice %418 {offsets = [0, 64], sizes = [2, 32], strides = [1, 1]} : vector<2x128xf32> to vector<2x32xf32>
    %435 = math.tanh %434 : vector<2x32xf32>
    %436 = vector.extract_strided_slice %418 {offsets = [0, 96], sizes = [2, 32], strides = [1, 1]} : vector<2x128xf32> to vector<2x32xf32>
    %437 = arith.negf %436 : vector<2x32xf32>
    %438 = math.exp %437 : vector<2x32xf32>
    %cst_109 = arith.constant 1.000000e+00 : f32
    %439 = vector.broadcast %cst_109 : f32 to vector<2x32xf32>
    %440 = arith.addf %439, %438 : vector<2x32xf32>
    %441 = arith.divf %439, %440 : vector<2x32xf32>
    %442 = arith.mulf %433, %377 : vector<2x32xf32>
    %443 = arith.mulf %432, %435 : vector<2x32xf32>
    %444 = arith.addf %442, %443 : vector<2x32xf32>
    %445 = math.tanh %444 : vector<2x32xf32>
    %446 = arith.mulf %441, %445 : vector<2x32xf32>
    %447 = vector.extract_strided_slice %425 {offsets = [0, 0], sizes = [2, 64], strides = [1, 1]} : vector<2x128xf32> to vector<2x64xf32>
    %448 = arith.negf %447 : vector<2x64xf32>
    %449 = math.exp %448 : vector<2x64xf32>
    %cst_110 = arith.constant 1.000000e+00 : f32
    %450 = vector.broadcast %cst_110 : f32 to vector<2x64xf32>
    %451 = arith.addf %450, %449 : vector<2x64xf32>
    %452 = arith.divf %450, %451 : vector<2x64xf32>
    %453 = vector.extract_strided_slice %452 {offsets = [0, 0], sizes = [2, 32], strides = [1, 1]} : vector<2x64xf32> to vector<2x32xf32>
    %454 = vector.extract_strided_slice %452 {offsets = [0, 32], sizes = [2, 32], strides = [1, 1]} : vector<2x64xf32> to vector<2x32xf32>
    %455 = vector.extract_strided_slice %425 {offsets = [0, 64], sizes = [2, 32], strides = [1, 1]} : vector<2x128xf32> to vector<2x32xf32>
    %456 = math.tanh %455 : vector<2x32xf32>
    %457 = vector.extract_strided_slice %425 {offsets = [0, 96], sizes = [2, 32], strides = [1, 1]} : vector<2x128xf32> to vector<2x32xf32>
    %458 = arith.negf %457 : vector<2x32xf32>
    %459 = math.exp %458 : vector<2x32xf32>
    %cst_111 = arith.constant 1.000000e+00 : f32
    %460 = vector.broadcast %cst_111 : f32 to vector<2x32xf32>
    %461 = arith.addf %460, %459 : vector<2x32xf32>
    %462 = arith.divf %460, %461 : vector<2x32xf32>
    %463 = arith.mulf %454, %398 : vector<2x32xf32>
    %464 = arith.mulf %453, %456 : vector<2x32xf32>
    %465 = arith.addf %463, %464 : vector<2x32xf32>
    %466 = math.tanh %465 : vector<2x32xf32>
    %467 = arith.mulf %462, %466 : vector<2x32xf32>
    %468 = arith.truncf %446 : vector<2x32xf32> to vector<2x32xbf16>
    %469 = arith.index_cast %c6_i32 : i32 to index
    %c0_112 = arith.constant 0 : index
    %c0_113 = arith.constant 0 : index
    %470 = vector.load %arg5[%469, %c0_112, %c0_113] : memref<8x2x32xbf16, #tpu.memory_space<vmem>>, vector<1x2x32xbf16>
    %471 = vector.shape_cast %470 : vector<1x2x32xbf16> to vector<2x32xbf16>
    %472 = vector.shape_cast %468 : vector<2x32xbf16> to vector<1x2x32xbf16>
    tpu.vector_store %arg5[%469, %c0_112, %c0_113], %472 {strides = array<i32>} : memref<8x2x32xbf16, #tpu.memory_space<vmem>>, vector<1x2x32xbf16>,
    %473 = arith.truncf %467 : vector<2x32xf32> to vector<2x32xbf16>
    %474 = arith.index_cast %411 : i32 to index
    %c0_114 = arith.constant 0 : index
    %c0_115 = arith.constant 0 : index
    %475 = vector.load %arg6[%474, %c0_114, %c0_115] : memref<8x2x32xbf16, #tpu.memory_space<vmem>>, vector<1x2x32xbf16>
    %476 = vector.shape_cast %475 : vector<1x2x32xbf16> to vector<2x32xbf16>
    %477 = vector.shape_cast %473 : vector<2x32xbf16> to vector<1x2x32xbf16>
    tpu.vector_store %arg6[%474, %c0_114, %c0_115], %477 {strides = array<i32>} : memref<8x2x32xbf16, #tpu.memory_space<vmem>>, vector<1x2x32xbf16>,
    %c7_i32_116 = arith.constant 7 : i32
    %c7_i32_117 = arith.constant 7 : i32
    %478 = arith.subi %c7_i32_117, %c7_i32_116 : i32
    %479 = arith.index_cast %c7_i32_116 : i32 to index
    %c0_118 = arith.constant 0 : index
    %c0_119 = arith.constant 0 : index
    %480 = vector.load %arg1[%479, %c0_118, %c0_119] : memref<8x2x128xbf16, #tpu.memory_space<vmem>>, vector<1x2x128xbf16>
    %481 = vector.shape_cast %480 : vector<1x2x128xbf16> to vector<2x128xbf16>
    %482 = arith.extf %481 : vector<2x128xbf16> to vector<2x128xf32>
    %483 = arith.truncf %446 : vector<2x32xf32> to vector<2x32xbf16>
    %cst_120 = arith.constant dense<0.000000e+00> : vector<2x128xf32>
    %484 = tpu.matmul %483, %3, %cst_120 {dimension_numbers = #tpu.dot_dimension_numbers<[1], [0], [0], [1], [0, 0, 1, 1], [], []>} : vector<2x32xbf16>, vector<32x128xbf16>, vector<2x128xf32> -> vector<2x128xf32>
    %485 = arith.addf %482, %484 : vector<2x128xf32>
    %486 = arith.index_cast %478 : i32 to index
    %c0_121 = arith.constant 0 : index
    %c0_122 = arith.constant 0 : index
    %487 = vector.load %arg2[%486, %c0_121, %c0_122] : memref<8x2x128xbf16, #tpu.memory_space<vmem>>, vector<1x2x128xbf16>
    %488 = vector.shape_cast %487 : vector<1x2x128xbf16> to vector<2x128xbf16>
    %489 = arith.extf %488 : vector<2x128xbf16> to vector<2x128xf32>
    %490 = arith.truncf %467 : vector<2x32xf32> to vector<2x32xbf16>
    %cst_123 = arith.constant dense<0.000000e+00> : vector<2x128xf32>
    %491 = tpu.matmul %490, %4, %cst_123 {dimension_numbers = #tpu.dot_dimension_numbers<[1], [0], [0], [1], [0, 0, 1, 1], [], []>} : vector<2x32xbf16>, vector<32x128xbf16>, vector<2x128xf32> -> vector<2x128xf32>
    %492 = arith.addf %489, %491 : vector<2x128xf32>
    %493 = vector.extract_strided_slice %485 {offsets = [0, 0], sizes = [2, 64], strides = [1, 1]} : vector<2x128xf32> to vector<2x64xf32>
    %494 = arith.negf %493 : vector<2x64xf32>
    %495 = math.exp %494 : vector<2x64xf32>
    %cst_124 = arith.constant 1.000000e+00 : f32
    %496 = vector.broadcast %cst_124 : f32 to vector<2x64xf32>
    %497 = arith.addf %496, %495 : vector<2x64xf32>
    %498 = arith.divf %496, %497 : vector<2x64xf32>
    %499 = vector.extract_strided_slice %498 {offsets = [0, 0], sizes = [2, 32], strides = [1, 1]} : vector<2x64xf32> to vector<2x32xf32>
    %500 = vector.extract_strided_slice %498 {offsets = [0, 32], sizes = [2, 32], strides = [1, 1]} : vector<2x64xf32> to vector<2x32xf32>
    %501 = vector.extract_strided_slice %485 {offsets = [0, 64], sizes = [2, 32], strides = [1, 1]} : vector<2x128xf32> to vector<2x32xf32>
    %502 = math.tanh %501 : vector<2x32xf32>
    %503 = vector.extract_strided_slice %485 {offsets = [0, 96], sizes = [2, 32], strides = [1, 1]} : vector<2x128xf32> to vector<2x32xf32>
    %504 = arith.negf %503 : vector<2x32xf32>
    %505 = math.exp %504 : vector<2x32xf32>
    %cst_125 = arith.constant 1.000000e+00 : f32
    %506 = vector.broadcast %cst_125 : f32 to vector<2x32xf32>
    %507 = arith.addf %506, %505 : vector<2x32xf32>
    %508 = arith.divf %506, %507 : vector<2x32xf32>
    %509 = arith.mulf %500, %444 : vector<2x32xf32>
    %510 = arith.mulf %499, %502 : vector<2x32xf32>
    %511 = arith.addf %509, %510 : vector<2x32xf32>
    %512 = math.tanh %511 : vector<2x32xf32>
    %513 = arith.mulf %508, %512 : vector<2x32xf32>
    %514 = vector.extract_strided_slice %492 {offsets = [0, 0], sizes = [2, 64], strides = [1, 1]} : vector<2x128xf32> to vector<2x64xf32>
    %515 = arith.negf %514 : vector<2x64xf32>
    %516 = math.exp %515 : vector<2x64xf32>
    %cst_126 = arith.constant 1.000000e+00 : f32
    %517 = vector.broadcast %cst_126 : f32 to vector<2x64xf32>
    %518 = arith.addf %517, %516 : vector<2x64xf32>
    %519 = arith.divf %517, %518 : vector<2x64xf32>
    %520 = vector.extract_strided_slice %519 {offsets = [0, 0], sizes = [2, 32], strides = [1, 1]} : vector<2x64xf32> to vector<2x32xf32>
    %521 = vector.extract_strided_slice %519 {offsets = [0, 32], sizes = [2, 32], strides = [1, 1]} : vector<2x64xf32> to vector<2x32xf32>
    %522 = vector.extract_strided_slice %492 {offsets = [0, 64], sizes = [2, 32], strides = [1, 1]} : vector<2x128xf32> to vector<2x32xf32>
    %523 = math.tanh %522 : vector<2x32xf32>
    %524 = vector.extract_strided_slice %492 {offsets = [0, 96], sizes = [2, 32], strides = [1, 1]} : vector<2x128xf32> to vector<2x32xf32>
    %525 = arith.negf %524 : vector<2x32xf32>
    %526 = math.exp %525 : vector<2x32xf32>
    %cst_127 = arith.constant 1.000000e+00 : f32
    %527 = vector.broadcast %cst_127 : f32 to vector<2x32xf32>
    %528 = arith.addf %527, %526 : vector<2x32xf32>
    %529 = arith.divf %527, %528 : vector<2x32xf32>
    %530 = arith.mulf %521, %465 : vector<2x32xf32>
    %531 = arith.mulf %520, %523 : vector<2x32xf32>
    %532 = arith.addf %530, %531 : vector<2x32xf32>
    %533 = math.tanh %532 : vector<2x32xf32>
    %534 = arith.mulf %529, %533 : vector<2x32xf32>
    %535 = arith.truncf %513 : vector<2x32xf32> to vector<2x32xbf16>
    %536 = arith.index_cast %c7_i32_116 : i32 to index
    %c0_128 = arith.constant 0 : index
    %c0_129 = arith.constant 0 : index
    %537 = vector.load %arg5[%536, %c0_128, %c0_129] : memref<8x2x32xbf16, #tpu.memory_space<vmem>>, vector<1x2x32xbf16>
    %538 = vector.shape_cast %537 : vector<1x2x32xbf16> to vector<2x32xbf16>
    %539 = vector.shape_cast %535 : vector<2x32xbf16> to vector<1x2x32xbf16>
    tpu.vector_store %arg5[%536, %c0_128, %c0_129], %539 {strides = array<i32>} : memref<8x2x32xbf16, #tpu.memory_space<vmem>>, vector<1x2x32xbf16>,
    %540 = arith.truncf %534 : vector<2x32xf32> to vector<2x32xbf16>
    %541 = arith.index_cast %478 : i32 to index
    %c0_130 = arith.constant 0 : index
    %c0_131 = arith.constant 0 : index
    %542 = vector.load %arg6[%541, %c0_130, %c0_131] : memref<8x2x32xbf16, #tpu.memory_space<vmem>>, vector<1x2x32xbf16>
    %543 = vector.shape_cast %542 : vector<1x2x32xbf16> to vector<2x32xbf16>
    %544 = vector.shape_cast %540 : vector<2x32xbf16> to vector<1x2x32xbf16>
    tpu.vector_store %arg6[%541, %c0_130, %c0_131], %544 {strides = array<i32>} : memref<8x2x32xbf16, #tpu.memory_space<vmem>>, vector<1x2x32xbf16>,
    %c8_i32 = arith.constant 8 : i32
    %c0_132 = arith.constant 0 : index
    %c0_133 = arith.constant 0 : index
    %545 = vector.load %arg7[%c0_132, %c0_133] : memref<2x32xf32, #tpu.memory_space<vmem>>, vector<2x32xf32>
    tpu.vector_store %arg7[%c0_132, %c0_133], %513 {strides = array<i32>} : memref<2x32xf32, #tpu.memory_space<vmem>>, vector<2x32xf32>,
    %c0_134 = arith.constant 0 : index
    %c0_135 = arith.constant 0 : index
    %546 = vector.load %arg8[%c0_134, %c0_135] : memref<2x32xf32, #tpu.memory_space<vmem>>, vector<2x32xf32>
    tpu.vector_store %arg8[%c0_134, %c0_135], %511 {strides = array<i32>} : memref<2x32xf32, #tpu.memory_space<vmem>>, vector<2x32xf32>,
    %c0_136 = arith.constant 0 : index
    %c0_137 = arith.constant 0 : index
    %547 = vector.load %arg9[%c0_136, %c0_137] : memref<2x32xf32, #tpu.memory_space<vmem>>, vector<2x32xf32>
    tpu.vector_store %arg9[%c0_136, %c0_137], %534 {strides = array<i32>} : memref<2x32xf32, #tpu.memory_space<vmem>>, vector<2x32xf32>,
    %c0_138 = arith.constant 0 : index
    %c0_139 = arith.constant 0 : index
    %548 = vector.load %arg10[%c0_138, %c0_139] : memref<2x32xf32, #tpu.memory_space<vmem>>, vector<2x32xf32>
    tpu.vector_store %arg10[%c0_138, %c0_139], %532 {strides = array<i32>} : memref<2x32xf32, #tpu.memory_space<vmem>>, vector<2x32xf32>,
    return
  }
  func.func @transform_0(%arg0: i32) -> (i32, i32, i32) {
    %c0_i32 = arith.constant 0 : i32
    %c0_i32_0 = arith.constant 0 : i32
    %c0_i32_1 = arith.constant 0 : i32
    return %arg0, %c0_i32, %c0_i32_0 : i32, i32, i32
  }
  func.func @transform_1(%arg0: i32) -> (i32, i32, i32) {
    %c1_i32 = arith.constant 1 : i32
    %0 = arith.subi %c1_i32, %arg0 : i32
    %c0_i32 = arith.constant 0 : i32
    %c0_i32_0 = arith.constant 0 : i32
    %c0_i32_1 = arith.constant 0 : i32
    return %0, %c0_i32, %c0_i32_0 : i32, i32, i32
  }
  func.func @transform_2(%arg0: i32) -> (i32, i32) {
    %c0_i32 = arith.constant 0 : i32
    %c0_i32_0 = arith.constant 0 : i32
    %c0_i32_1 = arith.constant 0 : i32
    return %c0_i32, %c0_i32_0 : i32, i32
  }
  func.func @transform_3(%arg0: i32) -> (i32, i32) {
    %c0_i32 = arith.constant 0 : i32
    %c0_i32_0 = arith.constant 0 : i32
    %c0_i32_1 = arith.constant 0 : i32
    return %c0_i32, %c0_i32_0 : i32, i32
  }
  func.func @transform_4(%arg0: i32) -> (i32, i32, i32) {
    %c0_i32 = arith.constant 0 : i32
    %c0_i32_0 = arith.constant 0 : i32
    %c0_i32_1 = arith.constant 0 : i32
    return %arg0, %c0_i32, %c0_i32_0 : i32, i32, i32
  }
  func.func @transform_5(%arg0: i32) -> (i32, i32, i32) {
    %c1_i32 = arith.constant 1 : i32
    %0 = arith.subi %c1_i32, %arg0 : i32
    %c0_i32 = arith.constant 0 : i32
    %c0_i32_0 = arith.constant 0 : i32
    %c0_i32_1 = arith.constant 0 : i32
    return %0, %c0_i32, %c0_i32_0 : i32, i32, i32
  }
}

</mosaic_0001>

<llo_original>
// kernel: _lambda_.2
$region0: #{_lambda_.2}
  #allocation0 [shape = 'u32[]', space=smem, size = 0x4, offset = 0x4, fixed_abs, tag = 'smem constant byte address 0x4 - core index']
  #allocation1 [shape = 'u32[144,128]{1,0:T(1,128)}', space=vmem, size = 0x12000, scoped, tag = 'internal scratch']
  #allocation2 [shape = 'f32[2,32]{1,0:T(2,128)}', space=vmem, size = 0x400, scoped, tag = 'scratch operand']
  #allocation3 [shape = 'f32[2,32]{1,0:T(2,128)}', space=vmem, size = 0x400, scoped, tag = 'scratch operand']
  #allocation4 [shape = 'f32[2,32]{1,0:T(2,128)}', space=vmem, size = 0x400, scoped, tag = 'scratch operand']
  #allocation5 [shape = 'f32[2,32]{1,0:T(2,128)}', space=vmem, size = 0x400, scoped, tag = 'scratch operand']
  %s0 = inlined_call_operand.vmem [shape: bf16[16,2,128], index: 0, kind: input, shape index: {}]
  %s1 = inlined_call_operand.vmem [shape: bf16[16,2,128], index: 1, kind: input, shape index: {}]
  %s2 = inlined_call_operand.vmem [shape: bf16[32,128], index: 2, kind: input, shape index: {}]
  %s3 = inlined_call_operand.vmem [shape: bf16[32,128], index: 3, kind: input, shape index: {}]
  %s4 = inlined_call_operand.vmem [shape: bf16[16,2,32], index: 4, kind: output, shape index: {0}]
  %s5 = inlined_call_operand.vmem [shape: bf16[16,2,32], index: 5, kind: output, shape index: {1}]
  %6 = xla_tuple %s4, %s5
  %s7 = sld [smem:[#allocation0]]
  $region61: #{_lambda_.2} parent=0
    _
  %s9 = ssub.s32 1, %s7
  %s10 = scalar_select 0, %s9, %s7
  loop: start=0, step=1, limit=4
  $region2: #{_lambda_.2} parent=0 // loop_pre_header
    _
  $region3: #{_lambda_.2} parent=0 // loop_header
    %s12 = sphi 0, %s16
    %p13 = scmp.ge.s32.totalorder %s12, 4
    %s22 = sphi 0, %s24
    %s25 = sphi 0, %s22
    %s26 = sphi 0, %s25
    %s42 = sphi 0, %s26
    %s50 = sphi 0, %s52
    %s53 = sphi 0, %s50
    %s54 = sphi 0, %s53
    %s70 = sphi 0, %s54
    %s74 = sphi 0, %s74
    %s76 = sphi 0, %s74
    %s77 = sphi 0, %s76
    %s91 = sphi 0, %s77
    %s95 = sphi 0, %s95
    %s97 = sphi 0, %s95
    %s98 = sphi 0, %s97
    %s112 = sphi 0, %s98
    %s118 = sphi 0, %s120
    %s121 = sphi 0, %s118
    %s122 = sphi 0, %s121
    %s138 = sphi 0, %s122
    %s146 = sphi 0, %s148
    %s149 = sphi 0, %s146
    %s150 = sphi 0, %s149
    %s166 = sphi 0, %s150
  $region4: #{_lambda_.2} parent=0 // loop_header_branch
    %15 = sbr.rel (%p13) target = $region8
  $region5: #{_lambda_.2} parent=0 // loop_body
    %s17 = ssub.s32 %s12, 1
    %s18 = ssub.s32 %s12, 2
    %s19 = sadd.s32 %s12, 1
    %s20 = ssub.s32 %s12, %s19
    %p21 = scmp.eq.s32.totalorder %s20, 0
    %s23 = sadd.s32 %s22, 1
    %s24 = scalar_select %p21, %s22, %s23
    %p27 = pneg %p21
    %p28 = scmp.eq.s32.totalorder %s12, 1
    %p29 = por %p27, %p28
    %p30 = scmp.ne.s32.totalorder %s22, %s25
    %p31 = scmp.eq.s32.totalorder %s12, 0
    %p32 = por %p30, %p31
    %p33 = scmp.ne.s32.totalorder %s22, %s25
    %p34 = scmp.eq.s32.totalorder %s17, 1
    %p35 = por %p33, %p34
    %p36 = scmp.ne.s32.totalorder %s25, %s26
    %p37 = scmp.eq.s32.totalorder %s17, 0
    %p38 = por %p36, %p37
    %p39 = scmp.ne.s32.totalorder %s25, %s26
    %p40 = scmp.eq.s32.totalorder %s18, 1
    %p41 = por %p39, %p40
    %p43 = scmp.ne.s32.totalorder %s26, %s42
    %p44 = scmp.eq.s32.totalorder %s18, 0
    %p45 = por %p43, %p44
    %s46 = ssub.s32 1, %s12
    %s47 = ssub.s32 1, %s19
    %s48 = ssub.s32 %s46, %s47
    %p49 = scmp.eq.s32.totalorder %s48, 0
    %s51 = sadd.s32 %s50, 1
    %s52 = scalar_select %p49, %s50, %s51
    %p55 = pneg %p49
    %p56 = scmp.eq.s32.totalorder %s12, 1
    %p57 = por %p55, %p56
    %p58 = scmp.ne.s32.totalorder %s50, %s53
    %p59 = scmp.eq.s32.totalorder %s12, 0
    %p60 = por %p58, %p59
    %p61 = scmp.ne.s32.totalorder %s50, %s53
    %p62 = scmp.eq.s32.totalorder %s17, 1
    %p63 = por %p61, %p62
    %p64 = scmp.ne.s32.totalorder %s53, %s54
    %p65 = scmp.eq.s32.totalorder %s17, 0
    %p66 = por %p64, %p65
    %p67 = scmp.ne.s32.totalorder %s53, %s54
    %p68 = scmp.eq.s32.totalorder %s18, 1
    %p69 = por %p67, %p68
    %p71 = scmp.ne.s32.totalorder %s54, %s70
    %p72 = scmp.eq.s32.totalorder %s18, 0
    %p73 = por %p71, %p72
    %s75 = sadd.s32 %s74, 1
    %p78 = scmp.eq.s32.totalorder %s12, 1
    %p79 = scmp.ne.s32.totalorder %s74, %s76
    %p80 = scmp.eq.s32.totalorder %s12, 0
    %p81 = por %p79, %p80
    %p82 = scmp.ne.s32.totalorder %s74, %s76
    %p83 = scmp.eq.s32.totalorder %s17, 1
    %p84 = por %p82, %p83
    %p85 = scmp.ne.s32.totalorder %s76, %s77
    %p86 = scmp.eq.s32.totalorder %s17, 0
    %p87 = por %p85, %p86
    %p88 = scmp.ne.s32.totalorder %s76, %s77
    %p89 = scmp.eq.s32.totalorder %s18, 1
    %p90 = por %p88, %p89
    %p92 = scmp.ne.s32.totalorder %s77, %s91
    %p93 = scmp.eq.s32.totalorder %s18, 0
    %p94 = por %p92, %p93
    %s96 = sadd.s32 %s95, 1
    %p99 = scmp.eq.s32.totalorder %s12, 1
    %p100 = scmp.ne.s32.totalorder %s95, %s97
    %p101 = scmp.eq.s32.totalorder %s12, 0
    %p102 = por %p100, %p101
    %p103 = scmp.ne.s32.totalorder %s95, %s97
    %p104 = scmp.eq.s32.totalorder %s17, 1
    %p105 = por %p103, %p104
    %p106 = scmp.ne.s32.totalorder %s97, %s98
    %p107 = scmp.eq.s32.totalorder %s17, 0
    %p108 = por %p106, %p107
    %p109 = scmp.ne.s32.totalorder %s97, %s98
    %p110 = scmp.eq.s32.totalorder %s18, 1
    %p111 = por %p109, %p110
    %p113 = scmp.ne.s32.totalorder %s98, %s112
    %p114 = scmp.eq.s32.totalorder %s18, 0
    %p115 = por %p113, %p114
    %s116 = ssub.s32 %s12, %s19
    %p117 = scmp.eq.s32.totalorder %s116, 0
    %s119 = sadd.s32 %s118, 1
    %s120 = scalar_select %p117, %s118, %s119
    %p123 = pneg %p117
    %p124 = scmp.eq.s32.totalorder %s12, 1
    %p125 = por %p123, %p124
    %p126 = scmp.ne.s32.totalorder %s118, %s121
    %p127 = scmp.eq.s32.totalorder %s12, 0
    %p128 = por %p126, %p127
    %p129 = scmp.ne.s32.totalorder %s118, %s121
    %p130 = scmp.eq.s32.totalorder %s17, 1
    %p131 = por %p129, %p130
    %p132 = scmp.ne.s32.totalorder %s121, %s122
    %p133 = scmp.eq.s32.totalorder %s17, 0
    %p134 = por %p132, %p133
    %p135 = scmp.ne.s32.totalorder %s121, %s122
    %p136 = scmp.eq.s32.totalorder %s18, 1
    %p137 = por %p135, %p136
    %p139 = scmp.ne.s32.totalorder %s122, %s138
    %p140 = scmp.eq.s32.totalorder %s18, 0
    %p141 = por %p139, %p140
    %s142 = ssub.s32 1, %s12
    %s143 = ssub.s32 1, %s19
    %s144 = ssub.s32 %s142, %s143
    %p145 = scmp.eq.s32.totalorder %s144, 0
    %s147 = sadd.s32 %s146, 1
    %s148 = scalar_select %p145, %s146, %s147
    %p151 = pneg %p145
    %p152 = scmp.eq.s32.totalorder %s12, 1
    %p153 = por %p151, %p152
    %p154 = scmp.ne.s32.totalorder %s146, %s149
    %p155 = scmp.eq.s32.totalorder %s12, 0
    %p156 = por %p154, %p155
    %p157 = scmp.ne.s32.totalorder %s146, %s149
    %p158 = scmp.eq.s32.totalorder %s17, 1
    %p159 = por %p157, %p158
    %p160 = scmp.ne.s32.totalorder %s149, %s150
    %p161 = scmp.eq.s32.totalorder %s17, 0
    %p162 = por %p160, %p161
    %p163 = scmp.ne.s32.totalorder %s149, %s150
    %p164 = scmp.eq.s32.totalorder %s18, 1
    %p165 = por %p163, %p164
    %p167 = scmp.ne.s32.totalorder %s150, %s166
    %p168 = scmp.eq.s32.totalorder %s18, 0
    %p169 = por %p167, %p168
    %p170 = scmp.le.s32.totalorder 1, %s12
    %p171 = scmp.lt.s32.totalorder %s12, 3
    %p172 = pnand %p170, %p171
    %p173 = pneg %p172
    // Predicated region
    $region9: #{_lambda_.2} parent=5 // pred_check
      _
    $region10: #{_lambda_.2} parent=5 // pred_check_branch
      %175 = sbr.rel (%p172) target = $region12
    $region11: #{_lambda_.2} parent=5 // pred_region
      %s176 = ssub.s32 %s12, 1
      // Predicated region
      $region13: #{_lambda_.2} parent=11 // pred_check
        %p177 = pneg %p87
      $region14: #{_lambda_.2} parent=11 // pred_check_branch
        %179 = sbr.rel (%p177) target = $region16
      $region15: #{_lambda_.2} parent=11 // pred_region
        _
      $region16: #{_lambda_.2} parent=11 // pred_fallthru
        _
      // Predicated region
      $region17: #{_lambda_.2} parent=11 // pred_check
        %p180 = pneg %p108
      $region18: #{_lambda_.2} parent=11 // pred_check_branch
        %182 = sbr.rel (%p180) target = $region20
      $region19: #{_lambda_.2} parent=11 // pred_region
        _
      $region20: #{_lambda_.2} parent=11 // pred_fallthru
        _
    $region12: #{_lambda_.2} parent=5 // pred_fallthru
      _
    %p183 = scmp.lt.s32.totalorder %s12, 2
    // Predicated region
    $region21: #{_lambda_.2} parent=5 // pred_check
      %p184 = pneg %p183
    $region22: #{_lambda_.2} parent=5 // pred_check_branch
      %186 = sbr.rel (%p184) target = $region24
    $region23: #{_lambda_.2} parent=5 // pred_region
      // Predicated region
      $region25: #{_lambda_.2} parent=23 // pred_check
        %p187 = pneg %p32
      $region26: #{_lambda_.2} parent=23 // pred_check_branch
        %189 = sbr.rel (%p187) target = $region28
      $region27: #{_lambda_.2} parent=23 // pred_region
        %s190 = smul.u32 8, %s12
        %p191 = scmp.lt.s32.totalorder %s190, 15
        %s192 = scalar_select %p191, %s190, 15
        %s193 = scalar_lea.vmem %s0, %s192
        %s194 = smul.u32 8, %s12
      $region28: #{_lambda_.2} parent=23 // pred_fallthru
        _
      // Predicated region
      $region29: #{_lambda_.2} parent=23 // pred_check
        %p195 = pneg %p60
      $region30: #{_lambda_.2} parent=23 // pred_check_branch
        %197 = sbr.rel (%p195) target = $region32
      $region31: #{_lambda_.2} parent=23 // pred_region
        %s198 = ssub.s32 1, %s12
        %s199 = smul.u32 8, %s198
        %p200 = scmp.lt.s32.totalorder %s199, 15
        %s201 = scalar_select %p200, %s199, 15
        %s202 = scalar_lea.vmem %s1, %s201
        %s203 = ssub.s32 1, %s12
        %s204 = smul.u32 8, %s203
      $region32: #{_lambda_.2} parent=23 // pred_fallthru
        _
    $region24: #{_lambda_.2} parent=5 // pred_fallthru
      _
    %p205 = scmp.le.s32.totalorder 1, %s12
    %p206 = scmp.lt.s32.totalorder %s12, 3
    %p207 = pnand %p205, %p206
    %p208 = pneg %p207
    // Predicated region
    $region33: #{_lambda_.2} parent=5 // pred_check
      _
    $region34: #{_lambda_.2} parent=5 // pred_check_branch
      %210 = sbr.rel (%p207) target = $region36
    $region35: #{_lambda_.2} parent=5 // pred_region
      %s211 = ssub.s32 %s12, 1
      %s212 = smul.u32 8, %s17
      %p213 = scmp.lt.s32.totalorder %s212, 15
      %s214 = scalar_select %p213, %s212, 15
      %s215 = scalar_lea.vmem %s0, %s214
      %p216 = pneg %p38
      %p217 = pneg %p35
      %s218 = ssub.s32 1, %s17
      %s219 = smul.u32 8, %s218
      %p220 = scmp.lt.s32.totalorder %s219, 15
      %s221 = scalar_select %p220, %s219, 15
      %s222 = scalar_lea.vmem %s1, %s221
      %p223 = pneg %p66
      %p224 = pneg %p63
      %p225 = pneg %p87
      %p226 = pneg %p84
      %p227 = pneg %p108
      %p228 = pneg %p105
      %p229 = pneg %p134
      %p230 = pneg %p131
      %s231 = smul.u32 8, %s17
      %p232 = scmp.lt.s32.totalorder %s231, 15
      %s233 = scalar_select %p232, %s231, 15
      %s234 = scalar_lea.vmem %s4, %s233
      %p235 = pneg %p162
      %p236 = pneg %p159
      %s237 = ssub.s32 1, %s17
      %s238 = smul.u32 8, %s237
      %p239 = scmp.lt.s32.totalorder %s238, 15
      %s240 = scalar_select %p239, %s238, 15
      %s241 = scalar_lea.vmem %s5, %s240
      %s242 = smul.u32 8, %s17
      %p243 = scmp.lt.s32.totalorder %s242, 15
      %s244 = scalar_select %p243, %s242, 15
      %s245 = scalar_lea.vmem %s0, %s244
      %s246 = smul.u32 8, %s17
      %s247 = ssub.s32 1, %s17
      %s248 = smul.u32 8, %s247
      %p249 = scmp.lt.s32.totalorder %s248, 15
      %s250 = scalar_select %p249, %s248, 15
      %s251 = scalar_lea.vmem %s1, %s250
      %s252 = ssub.s32 1, %s17
      %s253 = smul.u32 8, %s252
      %s254 = smul.u32 8, %s17
      %p255 = scmp.lt.s32.totalorder %s254, 15
      %s256 = scalar_select %p255, %s254, 15
      %s257 = scalar_lea.vmem %s4, %s256
      %s258 = smul.u32 8, %s17
      %s259 = ssub.s32 1, %s17
      %s260 = smul.u32 8, %s259
      %p261 = scmp.lt.s32.totalorder %s260, 15
      %s262 = scalar_select %p261, %s260, 15
      %s263 = scalar_lea.vmem %s5, %s262
      %s264 = ssub.s32 1, %s17
      %s265 = smul.u32 8, %s264
      %p267 = scmp.eq.s32.totalorder %s17, 0
      // Predicated region
      $region37: #{_lambda_.2} parent=35 // pred_check
        %p268 = pneg %p267
      $region38: #{_lambda_.2} parent=35 // pred_check_branch
        %270 = sbr.rel (%p268) target = $region40
      $region39: #{_lambda_.2} parent=35 // pred_region
        %vm271 = vcmask 254976
        %272 = vst.msk [vmem:[#allocation2] sm:$0x3] %vm271, 0.0
        %273 = vst.msk [vmem:[#allocation3] sm:$0x3] %vm271, 0.0
        %274 = vst.msk [vmem:[#allocation4] sm:$0x3] %vm271, 0.0
        %275 = vst.msk [vmem:[#allocation5] sm:$0x3] %vm271, 0.0
      $region40: #{_lambda_.2} parent=35 // pred_fallthru
        _
      %v276 = vld [vmem:[%s2] sm:$0xf]
      %v277 = vld [vmem:[%s2 + $0x4] sm:$0xf]
      %v278 = vld [vmem:[%s2 + $0x8] sm:$0xf]
      %v279 = vld [vmem:[%s2 + $0xc] sm:$0xf]
      %v280 = vld [vmem:[%s3] sm:$0xf]
      %v281 = vld [vmem:[%s3 + $0x4] sm:$0xf]
      %v282 = vld [vmem:[%s3 + $0x8] sm:$0xf]
      %v283 = vld [vmem:[%s3 + $0xc] sm:$0xf]
      %v284 = vld [vmem:[#allocation2] sm:$0x3]
      %v285 = vld [vmem:[#allocation3] sm:$0x3]
      %v286 = vld [vmem:[#allocation4] sm:$0x3]
      %v287 = vld [vmem:[#allocation5] sm:$0x3]
      %v288 = vld [vmem:[%s245] sm:$0x1]
      %v289 = vunpack.c.l.bf16 %v288
      %v290 = vpack.c.bf16 %v284, %v284
      %v295 = vunpack.c.l.b16 %v276
      %v296 = vunpack.c.l.b16 %v277
      %v297 = vunpack.c.l.b16 %v278
      %v298 = vunpack.c.l.b16 %v279
      %v299 = vpack.c.b16 %v296, %v295
      %v300 = vpack.c.b16 %v298, %v297
      %vm303 = vcmask 261120
      %v305 = vsel %vm303, %v290, 0
      %307 = vmatprep.subr.bf16.mxu0 0
      %308 = vmatpush1.bf16.msra.mxu0 0
      %309 = vmatprep.subr.bf16.mxu0 0
      %310 = vmatpush1.bf16.msra.mxu0 0
      %311 = vmatprep.subr.bf16.mxu0 0
      %312 = vmatpush1.bf16.msra.mxu0 0
      %313 = vmatprep.subr.bf16.mxu0 0
      %314 = vmatpush1.bf16.msra.mxu0 0
      %315 = vmatprep.subr.bf16.mxu0 0
      %316 = vmatpush1.bf16.msra.mxu0 0
      %317 = vmatprep.subr.bf16.mxu0 0
      %318 = vmatpush1.bf16.msra.mxu0 0
      %319 = vmatprep.subr.bf16.mxu0 0
      %320 = vmatpush1.bf16.msra.mxu0 %v300
      %321 = vmatprep.subr.bf16.mxu0 0
      %322 = vmatpush1.bf16.msra.mxu0 %v299
      %323 = vmatprep.subr.bf16.mxu0 0
      %324 = vmatpush2.bf16.msra.mxu0 0
      %325 = vmatprep.subr.bf16.mxu0 0
      %326 = vmatpush2.bf16.msra.mxu0 0
      %327 = vmatprep.subr.bf16.mxu0 0
      %328 = vmatpush2.bf16.msra.mxu0 0
      %329 = vmatprep.subr.bf16.mxu0 0
      %330 = vmatpush2.bf16.msra.mxu0 0
      %331 = vmatprep.subr.bf16.mxu0 0
      %332 = vmatpush2.bf16.msra.mxu0 0
      %333 = vmatprep.subr.bf16.mxu0 0
      %334 = vmatpush2.bf16.msra.mxu0 0
      %335 = vmatprep.subr.bf16.mxu0 0
      %336 = vmatpush2.bf16.msra.mxu0 0
      %337 = vmatprep.subr.bf16.mxu0 0
      %338 = vmatpush2.bf16.msra.mxu0 0
      %339 = vmatprep.mubr.bf16.mxu0 0
      %340 = vmatmul.mubr.bf16.gmra.mxu0 %v305
      %v341 = vpop.f32.mrf.mxu0
      %v342 = vadd.f32 0.0, %v341
      %v343 = vpop.f32.mrf.mxu0
      %v344 = vpop.f32.mrf.mxu0
      %v345 = vpop.f32.mrf.mxu0
      %346 = vdwg.mxu0
      %v347 = vadd.f32 %v289, %v342
      %s348 = scalar_lea.vmem %s251, 7
      %v349 = vld [vmem:[%s348] sm:$0x1]
      %v350 = vunpack.c.l.bf16 %v349
      %v351 = vpack.c.bf16 %v286, %v286
      %v356 = vunpack.c.l.b16 %v280
      %v357 = vunpack.c.l.b16 %v281
      %v358 = vunpack.c.l.b16 %v282
      %v359 = vunpack.c.l.b16 %v283
      %v360 = vpack.c.b16 %v357, %v356
      %v361 = vpack.c.b16 %v359, %v358
      %v365 = vsel %vm303, %v351, 0
      %367 = vmatprep.subr.bf16.mxu0 0
      %368 = vmatpush1.bf16.msra.mxu0 0
      %369 = vmatprep.subr.bf16.mxu0 0
      %370 = vmatpush1.bf16.msra.mxu0 0
      %371 = vmatprep.subr.bf16.mxu0 0
      %372 = vmatpush1.bf16.msra.mxu0 0
      %373 = vmatprep.subr.bf16.mxu0 0
      %374 = vmatpush1.bf16.msra.mxu0 0
      %375 = vmatprep.subr.bf16.mxu0 0
      %376 = vmatpush1.bf16.msra.mxu0 0
      %377 = vmatprep.subr.bf16.mxu0 0
      %378 = vmatpush1.bf16.msra.mxu0 0
      %379 = vmatprep.subr.bf16.mxu0 0
      %380 = vmatpush1.bf16.msra.mxu0 %v361
      %381 = vmatprep.subr.bf16.mxu0 0
      %382 = vmatpush1.bf16.msra.mxu0 %v360
      %383 = vmatprep.subr.bf16.mxu0 0
      %384 = vmatpush2.bf16.msra.mxu0 0
      %385 = vmatprep.subr.bf16.mxu0 0
      %386 = vmatpush2.bf16.msra.mxu0 0
      %387 = vmatprep.subr.bf16.mxu0 0
      %388 = vmatpush2.bf16.msra.mxu0 0
      %389 = vmatprep.subr.bf16.mxu0 0
      %390 = vmatpush2.bf16.msra.mxu0 0
      %391 = vmatprep.subr.bf16.mxu0 0
      %392 = vmatpush2.bf16.msra.mxu0 0
      %393 = vmatprep.subr.bf16.mxu0 0
      %394 = vmatpush2.bf16.msra.mxu0 0
      %395 = vmatprep.subr.bf16.mxu0 0
      %396 = vmatpush2.bf16.msra.mxu0 0
      %397 = vmatprep.subr.bf16.mxu0 0
      %398 = vmatpush2.bf16.msra.mxu0 0
      %399 = vmatprep.mubr.bf16.mxu0 0
      %400 = vmatmul.mubr.bf16.gmra.mxu0 %v365
      %v401 = vpop.f32.mrf.mxu0
      %v402 = vadd.f32 0.0, %v401
      %v403 = vpop.f32.mrf.mxu0
      %v404 = vpop.f32.mrf.mxu0
      %v405 = vpop.f32.mrf.mxu0
      %406 = vdwg.mxu0
      %v407 = vadd.f32 %v350, %v402
      %v408 = vxor.u32 %v347, 2147483648
      %v409 = vmul.f32 %v408, 1.442695
      %v410 = vpow.pop %v409
      %v411 = vadd.f32 %v410, 1.0
      %v412 = vrcp.pop %v411
      %v413 = vmul.f32 1.0, %v412
      %v414 = vtanh.pop %v347
      %v417 = vunpack.c.l.s4 1983009808
      %v418 = vunpack.c.0.s8 %v417
      %v419 = vlaneseq
      %v420 = vshrl.u32 %v419, 7
      %v421 = vsub.s32 %v418, %v420
      %v422 = vrot.slane %v285, %v421
      %423 = vrot.lane.b32.xlu0 %v422, 32
      %v424 = vpop.permute.xlu0 %423
      %v426 = vmul.f32 %v413, %v424
      %428 = vrot.lane.b32.xlu0 %v414, 64
      %v429 = vpop.permute.xlu0 %428
      %v431 = vmul.f32 %v413, %v429
      %433 = vrot.lane.b32.xlu0 %v431, 32
      %v434 = vpop.permute.xlu0 %433
      %v436 = vadd.f32 %v426, %v434
      %v437 = vtanh.pop %v436
      %439 = vrot.lane.b32.xlu0 %v437, 64
      %v440 = vpop.permute.xlu0 %439
      %v442 = vmul.f32 %v413, %v440
      %v443 = vxor.u32 %v407, 2147483648
      %v444 = vmul.f32 %v443, 1.442695
      %v445 = vpow.pop %v444
      %v446 = vadd.f32 %v445, 1.0
      %v447 = vrcp.pop %v446
      %v448 = vmul.f32 1.0, %v447
      %v449 = vtanh.pop %v407
      %v452 = vunpack.c.l.s4 1983009808
      %v453 = vunpack.c.0.s8 %v452
      %v454 = vlaneseq
      %v455 = vshrl.u32 %v454, 7
      %v456 = vsub.s32 %v453, %v455
      %v457 = vrot.slane %v287, %v456
      %458 = vrot.lane.b32.xlu0 %v457, 32
      %v459 = vpop.permute.xlu0 %458
      %v461 = vmul.f32 %v448, %v459
      %463 = vrot.lane.b32.xlu0 %v449, 64
      %v464 = vpop.permute.xlu0 %463
      %v466 = vmul.f32 %v448, %v464
      %468 = vrot.lane.b32.xlu0 %v466, 32
      %v469 = vpop.permute.xlu0 %468
      %v471 = vadd.f32 %v461, %v469
      %v472 = vtanh.pop %v471
      %474 = vrot.lane.b32.xlu0 %v472, 64
      %v475 = vpop.permute.xlu0 %474
      %v477 = vmul.f32 %v448, %v475
      %v478 = vpack.c.bf16 %v442, %v442
      %v481 = vunpack.c.l.s4 1966171168
      %v482 = vunpack.c.0.s8 %v481
      %v483 = vlaneseq
      %v484 = vshrl.u32 %v483, 7
      %v485 = vsub.s32 %v482, %v484
      %v486 = vrot.slane %v478, %v485
      %v488 = vunpack.c.l.s4 1966171168
      %v489 = vunpack.c.0.s8 %v488
      %v490 = vlaneseq
      %v491 = vshrl.u32 %v490, 7
      %v492 = vsub.s32 %v489, %v491
      %v493 = vrot.slane %v486, %v492
      %494 = vrot.lane.b32.xlu0 %v493, 32
      %v495 = vpop.permute.xlu0 %494
      %vm497 = vcmask 253952
      %498 = vst.msk [vmem:[%s257] sm:$0x1] %vm497, %v495
      %v499 = vpack.c.bf16 %v477, %v477
      %v502 = vunpack.c.l.s4 1966171168
      %v503 = vunpack.c.0.s8 %v502
      %v504 = vlaneseq
      %v505 = vshrl.u32 %v504, 7
      %v506 = vsub.s32 %v503, %v505
      %v507 = vrot.slane %v499, %v506
      %v509 = vunpack.c.l.s4 1966171168
      %v510 = vunpack.c.0.s8 %v509
      %v511 = vlaneseq
      %v512 = vshrl.u32 %v511, 7
      %v513 = vsub.s32 %v510, %v512
      %v514 = vrot.slane %v507, %v513
      %515 = vrot.lane.b32.xlu0 %v514, 32
      %v516 = vpop.permute.xlu0 %515
      %s518 = scalar_lea.vmem %s263, 7
      %519 = vst.msk [vmem:[%s518] sm:$0x1] %vm497, %v516
      %s520 = scalar_lea.vmem %s245, 1
      %v521 = vld [vmem:[%s520] sm:$0x1]
      %v522 = vunpack.c.l.bf16 %v521
      %523 = vrot.lane.b32.xlu0 %v478, 32
      %v524 = vpop.permute.xlu0 %523
      %v526 = vsel %vm303, %v524, 0
      %528 = vmatprep.subr.bf16.mxu0 0
      %529 = vmatpush1.bf16.msra.mxu0 0
      %530 = vmatprep.subr.bf16.mxu0 0
      %531 = vmatpush1.bf16.msra.mxu0 0
      %532 = vmatprep.subr.bf16.mxu0 0
      %533 = vmatpush1.bf16.msra.mxu0 0
      %534 = vmatprep.subr.bf16.mxu0 0
      %535 = vmatpush1.bf16.msra.mxu0 0
      %536 = vmatprep.subr.bf16.mxu0 0
      %537 = vmatpush1.bf16.msra.mxu0 0
      %538 = vmatprep.subr.bf16.mxu0 0
      %539 = vmatpush1.bf16.msra.mxu0 0
      %540 = vmatprep.subr.bf16.mxu0 0
      %541 = vmatpush1.bf16.msra.mxu0 %v300
      %542 = vmatprep.subr.bf16.mxu0 0
      %543 = vmatpush1.bf16.msra.mxu0 %v299
      %544 = vmatprep.subr.bf16.mxu0 0
      %545 = vmatpush2.bf16.msra.mxu0 0
      %546 = vmatprep.subr.bf16.mxu0 0
      %547 = vmatpush2.bf16.msra.mxu0 0
      %548 = vmatprep.subr.bf16.mxu0 0
      %549 = vmatpush2.bf16.msra.mxu0 0
      %550 = vmatprep.subr.bf16.mxu0 0
      %551 = vmatpush2.bf16.msra.mxu0 0
      %552 = vmatprep.subr.bf16.mxu0 0
      %553 = vmatpush2.bf16.msra.mxu0 0
      %554 = vmatprep.subr.bf16.mxu0 0
      %555 = vmatpush2.bf16.msra.mxu0 0
      %556 = vmatprep.subr.bf16.mxu0 0
      %557 = vmatpush2.bf16.msra.mxu0 0
      %558 = vmatprep.subr.bf16.mxu0 0
      %559 = vmatpush2.bf16.msra.mxu0 0
      %560 = vmatprep.mubr.bf16.mxu0 0
      %561 = vmatmul.mubr.bf16.gmra.mxu0 %v526
      %v562 = vpop.f32.mrf.mxu0
      %v563 = vadd.f32 0.0, %v562
      %v564 = vpop.f32.mrf.mxu0
      %v565 = vpop.f32.mrf.mxu0
      %v566 = vpop.f32.mrf.mxu0
      %567 = vdwg.mxu0
      %v568 = vadd.f32 %v522, %v563
      %s569 = scalar_lea.vmem %s251, 6
      %v570 = vld [vmem:[%s569] sm:$0x1]
      %v571 = vunpack.c.l.bf16 %v570
      %572 = vrot.lane.b32.xlu0 %v499, 32
      %v573 = vpop.permute.xlu0 %572
      %v575 = vsel %vm303, %v573, 0
      %577 = vmatprep.subr.bf16.mxu0 0
      %578 = vmatpush1.bf16.msra.mxu0 0
      %579 = vmatprep.subr.bf16.mxu0 0
      %580 = vmatpush1.bf16.msra.mxu0 0
      %581 = vmatprep.subr.bf16.mxu0 0
      %582 = vmatpush1.bf16.msra.mxu0 0
      %583 = vmatprep.subr.bf16.mxu0 0
      %584 = vmatpush1.bf16.msra.mxu0 0
      %585 = vmatprep.subr.bf16.mxu0 0
      %586 = vmatpush1.bf16.msra.mxu0 0
      %587 = vmatprep.subr.bf16.mxu0 0
      %588 = vmatpush1.bf16.msra.mxu0 0
      %589 = vmatprep.subr.bf16.mxu0 0
      %590 = vmatpush1.bf16.msra.mxu0 %v361
      %591 = vmatprep.subr.bf16.mxu0 0
      %592 = vmatpush1.bf16.msra.mxu0 %v360
      %593 = vmatprep.subr.bf16.mxu0 0
      %594 = vmatpush2.bf16.msra.mxu0 0
      %595 = vmatprep.subr.bf16.mxu0 0
      %596 = vmatpush2.bf16.msra.mxu0 0
      %597 = vmatprep.subr.bf16.mxu0 0
      %598 = vmatpush2.bf16.msra.mxu0 0
      %599 = vmatprep.subr.bf16.mxu0 0
      %600 = vmatpush2.bf16.msra.mxu0 0
      %601 = vmatprep.subr.bf16.mxu0 0
      %602 = vmatpush2.bf16.msra.mxu0 0
      %603 = vmatprep.subr.bf16.mxu0 0
      %604 = vmatpush2.bf16.msra.mxu0 0
      %605 = vmatprep.subr.bf16.mxu0 0
      %606 = vmatpush2.bf16.msra.mxu0 0
      %607 = vmatprep.subr.bf16.mxu0 0
      %608 = vmatpush2.bf16.msra.mxu0 0
      %609 = vmatprep.mubr.bf16.mxu0 0
      %610 = vmatmul.mubr.bf16.gmra.mxu0 %v575
      %v611 = vpop.f32.mrf.mxu0
      %v612 = vadd.f32 0.0, %v611
      %v613 = vpop.f32.mrf.mxu0
      %v614 = vpop.f32.mrf.mxu0
      %v615 = vpop.f32.mrf.mxu0
      %616 = vdwg.mxu0
      %v617 = vadd.f32 %v571, %v612
      %v618 = vxor.u32 %v568, 2147483648
      %v619 = vmul.f32 %v618, 1.442695
      %v620 = vpow.pop %v619
      %v621 = vadd.f32 %v620, 1.0
      %v622 = vrcp.pop %v621
      %v623 = vmul.f32 1.0, %v622
      %v624 = vtanh.pop %v568
      %v625 = vmul.f32 %v623, %v436
      %627 = vrot.lane.b32.xlu0 %v624, 64
      %v628 = vpop.permute.xlu0 %627
      %v630 = vmul.f32 %v623, %v628
      %632 = vrot.lane.b32.xlu0 %v630, 32
      %v633 = vpop.permute.xlu0 %632
      %v635 = vadd.f32 %v625, %v633
      %v636 = vtanh.pop %v635
      %638 = vrot.lane.b32.xlu0 %v636, 64
      %v639 = vpop.permute.xlu0 %638
      %v641 = vmul.f32 %v623, %v639
      %v642 = vxor.u32 %v617, 2147483648
      %v643 = vmul.f32 %v642, 1.442695
      %v644 = vpow.pop %v643
      %v645 = vadd.f32 %v644, 1.0
      %v646 = vrcp.pop %v645
      %v647 = vmul.f32 1.0, %v646
      %v648 = vtanh.pop %v617
      %v649 = vmul.f32 %v647, %v471
      %651 = vrot.lane.b32.xlu0 %v648, 64
      %v652 = vpop.permute.xlu0 %651
      %v654 = vmul.f32 %v647, %v652
      %656 = vrot.lane.b32.xlu0 %v654, 32
      %v657 = vpop.permute.xlu0 %656
      %v659 = vadd.f32 %v649, %v657
      %v660 = vtanh.pop %v659
      %662 = vrot.lane.b32.xlu0 %v660, 64
      %v663 = vpop.permute.xlu0 %662
      %v665 = vmul.f32 %v647, %v663
      %v666 = vpack.c.bf16 %v641, %v641
      %v669 = vunpack.c.l.s4 1966171168
      %v670 = vunpack.c.0.s8 %v669
      %v671 = vlaneseq
      %v672 = vshrl.u32 %v671, 7
      %v673 = vsub.s32 %v670, %v672
      %v674 = vrot.slane %v666, %v673
      %v676 = vunpack.c.l.s4 1966171168
      %v677 = vunpack.c.0.s8 %v676
      %v678 = vlaneseq
      %v679 = vshrl.u32 %v678, 7
      %v680 = vsub.s32 %v677, %v679
      %v681 = vrot.slane %v674, %v680
      %682 = vrot.lane.b32.xlu0 %v681, 32
      %v683 = vpop.permute.xlu0 %682
      %s685 = scalar_lea.vmem %s257, 1
      %686 = vst.msk [vmem:[%s685] sm:$0x1] %vm497, %v683
      %v687 = vpack.c.bf16 %v665, %v665
      %v690 = vunpack.c.l.s4 1966171168
      %v691 = vunpack.c.0.s8 %v690
      %v692 = vlaneseq
      %v693 = vshrl.u32 %v692, 7
      %v694 = vsub.s32 %v691, %v693
      %v695 = vrot.slane %v687, %v694
      %v697 = vunpack.c.l.s4 1966171168
      %v698 = vunpack.c.0.s8 %v697
      %v699 = vlaneseq
      %v700 = vshrl.u32 %v699, 7
      %v701 = vsub.s32 %v698, %v700
      %v702 = vrot.slane %v695, %v701
      %703 = vrot.lane.b32.xlu0 %v702, 32
      %v704 = vpop.permute.xlu0 %703
      %s706 = scalar_lea.vmem %s263, 6
      %707 = vst.msk [vmem:[%s706] sm:$0x1] %vm497, %v704
      %s708 = scalar_lea.vmem %s245, 2
      %v709 = vld [vmem:[%s708] sm:$0x1]
      %v710 = vunpack.c.l.bf16 %v709
      %711 = vrot.lane.b32.xlu0 %v666, 32
      %v712 = vpop.permute.xlu0 %711
      %v714 = vsel %vm303, %v712, 0
      %716 = vmatprep.subr.bf16.mxu0 0
      %717 = vmatpush1.bf16.msra.mxu0 0
      %718 = vmatprep.subr.bf16.mxu0 0
      %719 = vmatpush1.bf16.msra.mxu0 0
      %720 = vmatprep.subr.bf16.mxu0 0
      %721 = vmatpush1.bf16.msra.mxu0 0
      %722 = vmatprep.subr.bf16.mxu0 0
      %723 = vmatpush1.bf16.msra.mxu0 0
      %724 = vmatprep.subr.bf16.mxu0 0
      %725 = vmatpush1.bf16.msra.mxu0 0
      %726 = vmatprep.subr.bf16.mxu0 0
      %727 = vmatpush1.bf16.msra.mxu0 0
      %728 = vmatprep.subr.bf16.mxu0 0
      %729 = vmatpush1.bf16.msra.mxu0 %v300
      %730 = vmatprep.subr.bf16.mxu0 0
      %731 = vmatpush1.bf16.msra.mxu0 %v299
      %732 = vmatprep.subr.bf16.mxu0 0
      %733 = vmatpush2.bf16.msra.mxu0 0
      %734 = vmatprep.subr.bf16.mxu0 0
      %735 = vmatpush2.bf16.msra.mxu0 0
      %736 = vmatprep.subr.bf16.mxu0 0
      %737 = vmatpush2.bf16.msra.mxu0 0
      %738 = vmatprep.subr.bf16.mxu0 0
      %739 = vmatpush2.bf16.msra.mxu0 0
      %740 = vmatprep.subr.bf16.mxu0 0
      %741 = vmatpush2.bf16.msra.mxu0 0
      %742 = vmatprep.subr.bf16.mxu0 0
      %743 = vmatpush2.bf16.msra.mxu0 0
      %744 = vmatprep.subr.bf16.mxu0 0
      %745 = vmatpush2.bf16.msra.mxu0 0
      %746 = vmatprep.subr.bf16.mxu0 0
      %747 = vmatpush2.bf16.msra.mxu0 0
      %748 = vmatprep.mubr.bf16.mxu0 0
      %749 = vmatmul.mubr.bf16.gmra.mxu0 %v714
      %v750 = vpop.f32.mrf.mxu0
      %v751 = vadd.f32 0.0, %v750
      %v752 = vpop.f32.mrf.mxu0
      %v753 = vpop.f32.mrf.mxu0
      %v754 = vpop.f32.mrf.mxu0
      %755 = vdwg.mxu0
      %v756 = vadd.f32 %v710, %v751
      %s757 = scalar_lea.vmem %s251, 5
      %v758 = vld [vmem:[%s757] sm:$0x1]
      %v759 = vunpack.c.l.bf16 %v758
      %760 = vrot.lane.b32.xlu0 %v687, 32
      %v761 = vpop.permute.xlu0 %760
      %v763 = vsel %vm303, %v761, 0
      %765 = vmatprep.subr.bf16.mxu0 0
      %766 = vmatpush1.bf16.msra.mxu0 0
      %767 = vmatprep.subr.bf16.mxu0 0
      %768 = vmatpush1.bf16.msra.mxu0 0
      %769 = vmatprep.subr.bf16.mxu0 0
      %770 = vmatpush1.bf16.msra.mxu0 0
      %771 = vmatprep.subr.bf16.mxu0 0
      %772 = vmatpush1.bf16.msra.mxu0 0
      %773 = vmatprep.subr.bf16.mxu0 0
      %774 = vmatpush1.bf16.msra.mxu0 0
      %775 = vmatprep.subr.bf16.mxu0 0
      %776 = vmatpush1.bf16.msra.mxu0 0
      %777 = vmatprep.subr.bf16.mxu0 0
      %778 = vmatpush1.bf16.msra.mxu0 %v361
      %779 = vmatprep.subr.bf16.mxu0 0
      %780 = vmatpush1.bf16.msra.mxu0 %v360
      %781 = vmatprep.subr.bf16.mxu0 0
      %782 = vmatpush2.bf16.msra.mxu0 0
      %783 = vmatprep.subr.bf16.mxu0 0
      %784 = vmatpush2.bf16.msra.mxu0 0
      %785 = vmatprep.subr.bf16.mxu0 0
      %786 = vmatpush2.bf16.msra.mxu0 0
      %787 = vmatprep.subr.bf16.mxu0 0
      %788 = vmatpush2.bf16.msra.mxu0 0
      %789 = vmatprep.subr.bf16.mxu0 0
      %790 = vmatpush2.bf16.msra.mxu0 0
      %791 = vmatprep.subr.bf16.mxu0 0
      %792 = vmatpush2.bf16.msra.mxu0 0
      %793 = vmatprep.subr.bf16.mxu0 0
      %794 = vmatpush2.bf16.msra.mxu0 0
      %795 = vmatprep.subr.bf16.mxu0 0
      %796 = vmatpush2.bf16.msra.mxu0 0
      %797 = vmatprep.mubr.bf16.mxu0 0
      %798 = vmatmul.mubr.bf16.gmra.mxu0 %v763
      %v799 = vpop.f32.mrf.mxu0
      %v800 = vadd.f32 0.0, %v799
      %v801 = vpop.f32.mrf.mxu0
      %v802 = vpop.f32.mrf.mxu0
      %v803 = vpop.f32.mrf.mxu0
      %804 = vdwg.mxu0
      %v805 = vadd.f32 %v759, %v800
      %v806 = vxor.u32 %v756, 2147483648
      %v807 = vmul.f32 %v806, 1.442695
      %v808 = vpow.pop %v807
      %v809 = vadd.f32 %v808, 1.0
      %v810 = vrcp.pop %v809
      %v811 = vmul.f32 1.0, %v810
      %v812 = vtanh.pop %v756
      %v813 = vmul.f32 %v811, %v635
      %815 = vrot.lane.b32.xlu0 %v812, 64
      %v816 = vpop.permute.xlu0 %815
      %v818 = vmul.f32 %v811, %v816
      %820 = vrot.lane.b32.xlu0 %v818, 32
      %v821 = vpop.permute.xlu0 %820
      %v823 = vadd.f32 %v813, %v821
      %v824 = vtanh.pop %v823
      %826 = vrot.lane.b32.xlu0 %v824, 64
      %v827 = vpop.permute.xlu0 %826
      %v829 = vmul.f32 %v811, %v827
      %v830 = vxor.u32 %v805, 2147483648
      %v831 = vmul.f32 %v830, 1.442695
      %v832 = vpow.pop %v831
      %v833 = vadd.f32 %v832, 1.0
      %v834 = vrcp.pop %v833
      %v835 = vmul.f32 1.0, %v834
      %v836 = vtanh.pop %v805
      %v837 = vmul.f32 %v835, %v659
      %839 = vrot.lane.b32.xlu0 %v836, 64
      %v840 = vpop.permute.xlu0 %839
      %v842 = vmul.f32 %v835, %v840
      %844 = vrot.lane.b32.xlu0 %v842, 32
      %v845 = vpop.permute.xlu0 %844
      %v847 = vadd.f32 %v837, %v845
      %v848 = vtanh.pop %v847
      %850 = vrot.lane.b32.xlu0 %v848, 64
      %v851 = vpop.permute.xlu0 %850
      %v853 = vmul.f32 %v835, %v851
      %v854 = vpack.c.bf16 %v829, %v829
      %v857 = vunpack.c.l.s4 1966171168
      %v858 = vunpack.c.0.s8 %v857
      %v859 = vlaneseq
      %v860 = vshrl.u32 %v859, 7
      %v861 = vsub.s32 %v858, %v860
      %v862 = vrot.slane %v854, %v861
      %v864 = vunpack.c.l.s4 1966171168
      %v865 = vunpack.c.0.s8 %v864
      %v866 = vlaneseq
      %v867 = vshrl.u32 %v866, 7
      %v868 = vsub.s32 %v865, %v867
      %v869 = vrot.slane %v862, %v868
      %870 = vrot.lane.b32.xlu0 %v869, 32
      %v871 = vpop.permute.xlu0 %870
      %s873 = scalar_lea.vmem %s257, 2
      %874 = vst.msk [vmem:[%s873] sm:$0x1] %vm497, %v871
      %v875 = vpack.c.bf16 %v853, %v853
      %v878 = vunpack.c.l.s4 1966171168
      %v879 = vunpack.c.0.s8 %v878
      %v880 = vlaneseq
      %v881 = vshrl.u32 %v880, 7
      %v882 = vsub.s32 %v879, %v881
      %v883 = vrot.slane %v875, %v882
      %v885 = vunpack.c.l.s4 1966171168
      %v886 = vunpack.c.0.s8 %v885
      %v887 = vlaneseq
      %v888 = vshrl.u32 %v887, 7
      %v889 = vsub.s32 %v886, %v888
      %v890 = vrot.slane %v883, %v889
      %891 = vrot.lane.b32.xlu0 %v890, 32
      %v892 = vpop.permute.xlu0 %891
      %s894 = scalar_lea.vmem %s263, 5
      %895 = vst.msk [vmem:[%s894] sm:$0x1] %vm497, %v892
      %s896 = scalar_lea.vmem %s245, 3
      %v897 = vld [vmem:[%s896] sm:$0x1]
      %v898 = vunpack.c.l.bf16 %v897
      %899 = vrot.lane.b32.xlu0 %v854, 32
      %v900 = vpop.permute.xlu0 %899
      %v902 = vsel %vm303, %v900, 0
      %904 = vmatprep.subr.bf16.mxu0 0
      %905 = vmatpush1.bf16.msra.mxu0 0
      %906 = vmatprep.subr.bf16.mxu0 0
      %907 = vmatpush1.bf16.msra.mxu0 0
      %908 = vmatprep.subr.bf16.mxu0 0
      %909 = vmatpush1.bf16.msra.mxu0 0
      %910 = vmatprep.subr.bf16.mxu0 0
      %911 = vmatpush1.bf16.msra.mxu0 0
      %912 = vmatprep.subr.bf16.mxu0 0
      %913 = vmatpush1.bf16.msra.mxu0 0
      %914 = vmatprep.subr.bf16.mxu0 0
      %915 = vmatpush1.bf16.msra.mxu0 0
      %916 = vmatprep.subr.bf16.mxu0 0
      %917 = vmatpush1.bf16.msra.mxu0 %v300
      %918 = vmatprep.subr.bf16.mxu0 0
      %919 = vmatpush1.bf16.msra.mxu0 %v299
      %920 = vmatprep.subr.bf16.mxu0 0
      %921 = vmatpush2.bf16.msra.mxu0 0
      %922 = vmatprep.subr.bf16.mxu0 0
      %923 = vmatpush2.bf16.msra.mxu0 0
      %924 = vmatprep.subr.bf16.mxu0 0
      %925 = vmatpush2.bf16.msra.mxu0 0
      %926 = vmatprep.subr.bf16.mxu0 0
      %927 = vmatpush2.bf16.msra.mxu0 0
      %928 = vmatprep.subr.bf16.mxu0 0
      %929 = vmatpush2.bf16.msra.mxu0 0
      %930 = vmatprep.subr.bf16.mxu0 0
      %931 = vmatpush2.bf16.msra.mxu0 0
      %932 = vmatprep.subr.bf16.mxu0 0
      %933 = vmatpush2.bf16.msra.mxu0 0
      %934 = vmatprep.subr.bf16.mxu0 0
      %935 = vmatpush2.bf16.msra.mxu0 0
      %936 = vmatprep.mubr.bf16.mxu0 0
      %937 = vmatmul.mubr.bf16.gmra.mxu0 %v902
      %v938 = vpop.f32.mrf.mxu0
      %v939 = vadd.f32 0.0, %v938
      %v940 = vpop.f32.mrf.mxu0
      %v941 = vpop.f32.mrf.mxu0
      %v942 = vpop.f32.mrf.mxu0
      %943 = vdwg.mxu0
      %v944 = vadd.f32 %v898, %v939
      %s945 = scalar_lea.vmem %s251, 4
      %v946 = vld [vmem:[%s945] sm:$0x1]
      %v947 = vunpack.c.l.bf16 %v946
      %948 = vrot.lane.b32.xlu0 %v875, 32
      %v949 = vpop.permute.xlu0 %948
      %v951 = vsel %vm303, %v949, 0
      %953 = vmatprep.subr.bf16.mxu0 0
      %954 = vmatpush1.bf16.msra.mxu0 0
      %955 = vmatprep.subr.bf16.mxu0 0
      %956 = vmatpush1.bf16.msra.mxu0 0
      %957 = vmatprep.subr.bf16.mxu0 0
      %958 = vmatpush1.bf16.msra.mxu0 0
      %959 = vmatprep.subr.bf16.mxu0 0
      %960 = vmatpush1.bf16.msra.mxu0 0
      %961 = vmatprep.subr.bf16.mxu0 0
      %962 = vmatpush1.bf16.msra.mxu0 0
      %963 = vmatprep.subr.bf16.mxu0 0
      %964 = vmatpush1.bf16.msra.mxu0 0
      %965 = vmatprep.subr.bf16.mxu0 0
      %966 = vmatpush1.bf16.msra.mxu0 %v361
      %967 = vmatprep.subr.bf16.mxu0 0
      %968 = vmatpush1.bf16.msra.mxu0 %v360
      %969 = vmatprep.subr.bf16.mxu0 0
      %970 = vmatpush2.bf16.msra.mxu0 0
      %971 = vmatprep.subr.bf16.mxu0 0
      %972 = vmatpush2.bf16.msra.mxu0 0
      %973 = vmatprep.subr.bf16.mxu0 0
      %974 = vmatpush2.bf16.msra.mxu0 0
      %975 = vmatprep.subr.bf16.mxu0 0
      %976 = vmatpush2.bf16.msra.mxu0 0
      %977 = vmatprep.subr.bf16.mxu0 0
      %978 = vmatpush2.bf16.msra.mxu0 0
      %979 = vmatprep.subr.bf16.mxu0 0
      %980 = vmatpush2.bf16.msra.mxu0 0
      %981 = vmatprep.subr.bf16.mxu0 0
      %982 = vmatpush2.bf16.msra.mxu0 0
      %983 = vmatprep.subr.bf16.mxu0 0
      %984 = vmatpush2.bf16.msra.mxu0 0
      %985 = vmatprep.mubr.bf16.mxu0 0
      %986 = vmatmul.mubr.bf16.gmra.mxu0 %v951
      %v987 = vpop.f32.mrf.mxu0
      %v988 = vadd.f32 0.0, %v987
      %v989 = vpop.f32.mrf.mxu0
      %v990 = vpop.f32.mrf.mxu0
      %v991 = vpop.f32.mrf.mxu0
      %992 = vdwg.mxu0
      %v993 = vadd.f32 %v947, %v988
      %v994 = vxor.u32 %v944, 2147483648
      %v995 = vmul.f32 %v994, 1.442695
      %v996 = vpow.pop %v995
      %v997 = vadd.f32 %v996, 1.0
      %v998 = vrcp.pop %v997
      %v999 = vmul.f32 1.0, %v998
      %v1000 = vtanh.pop %v944
      %v1001 = vmul.f32 %v999, %v823
      %1003 = vrot.lane.b32.xlu0 %v1000, 64
      %v1004 = vpop.permute.xlu0 %1003
      %v1006 = vmul.f32 %v999, %v1004
      %1008 = vrot.lane.b32.xlu0 %v1006, 32
      %v1009 = vpop.permute.xlu0 %1008
      %v1011 = vadd.f32 %v1001, %v1009
      %v1012 = vtanh.pop %v1011
      %1014 = vrot.lane.b32.xlu0 %v1012, 64
      %v1015 = vpop.permute.xlu0 %1014
      %v1017 = vmul.f32 %v999, %v1015
      %v1018 = vxor.u32 %v993, 2147483648
      %v1019 = vmul.f32 %v1018, 1.442695
      %v1020 = vpow.pop %v1019
      %v1021 = vadd.f32 %v1020, 1.0
      %v1022 = vrcp.pop %v1021
      %v1023 = vmul.f32 1.0, %v1022
      %v1024 = vtanh.pop %v993
      %v1025 = vmul.f32 %v1023, %v847
      %1027 = vrot.lane.b32.xlu0 %v1024, 64
      %v1028 = vpop.permute.xlu0 %1027
      %v1030 = vmul.f32 %v1023, %v1028
      %1032 = vrot.lane.b32.xlu0 %v1030, 32
      %v1033 = vpop.permute.xlu0 %1032
      %v1035 = vadd.f32 %v1025, %v1033
      %v1036 = vtanh.pop %v1035
      %1038 = vrot.lane.b32.xlu0 %v1036, 64
      %v1039 = vpop.permute.xlu0 %1038
      %v1041 = vmul.f32 %v1023, %v1039
      %v1042 = vpack.c.bf16 %v1017, %v1017
      %v1045 = vunpack.c.l.s4 1966171168
      %v1046 = vunpack.c.0.s8 %v1045
      %v1047 = vlaneseq
      %v1048 = vshrl.u32 %v1047, 7
      %v1049 = vsub.s32 %v1046, %v1048
      %v1050 = vrot.slane %v1042, %v1049
      %v1052 = vunpack.c.l.s4 1966171168
      %v1053 = vunpack.c.0.s8 %v1052
      %v1054 = vlaneseq
      %v1055 = vshrl.u32 %v1054, 7
      %v1056 = vsub.s32 %v1053, %v1055
      %v1057 = vrot.slane %v1050, %v1056
      %1058 = vrot.lane.b32.xlu0 %v1057, 32
      %v1059 = vpop.permute.xlu0 %1058
      %s1061 = scalar_lea.vmem %s257, 3
      %1062 = vst.msk [vmem:[%s1061] sm:$0x1] %vm497, %v1059
      %v1063 = vpack.c.bf16 %v1041, %v1041
      %v1066 = vunpack.c.l.s4 1966171168
      %v1067 = vunpack.c.0.s8 %v1066
      %v1068 = vlaneseq
      %v1069 = vshrl.u32 %v1068, 7
      %v1070 = vsub.s32 %v1067, %v1069
      %v1071 = vrot.slane %v1063, %v1070
      %v1073 = vunpack.c.l.s4 1966171168
      %v1074 = vunpack.c.0.s8 %v1073
      %v1075 = vlaneseq
      %v1076 = vshrl.u32 %v1075, 7
      %v1077 = vsub.s32 %v1074, %v1076
      %v1078 = vrot.slane %v1071, %v1077
      %1079 = vrot.lane.b32.xlu0 %v1078, 32
      %v1080 = vpop.permute.xlu0 %1079
      %s1082 = scalar_lea.vmem %s263, 4
      %1083 = vst.msk [vmem:[%s1082] sm:$0x1] %vm497, %v1080
      %s1084 = scalar_lea.vmem %s245, 4
      %v1085 = vld [vmem:[%s1084] sm:$0x1]
      %v1086 = vunpack.c.l.bf16 %v1085
      %1087 = vrot.lane.b32.xlu0 %v1042, 32
      %v1088 = vpop.permute.xlu0 %1087
      %v1090 = vsel %vm303, %v1088, 0
      %1092 = vmatprep.subr.bf16.mxu0 0
      %1093 = vmatpush1.bf16.msra.mxu0 0
      %1094 = vmatprep.subr.bf16.mxu0 0
      %1095 = vmatpush1.bf16.msra.mxu0 0
      %1096 = vmatprep.subr.bf16.mxu0 0
      %1097 = vmatpush1.bf16.msra.mxu0 0
      %1098 = vmatprep.subr.bf16.mxu0 0
      %1099 = vmatpush1.bf16.msra.mxu0 0
      %1100 = vmatprep.subr.bf16.mxu0 0
      %1101 = vmatpush1.bf16.msra.mxu0 0
      %1102 = vmatprep.subr.bf16.mxu0 0
      %1103 = vmatpush1.bf16.msra.mxu0 0
      %1104 = vmatprep.subr.bf16.mxu0 0
      %1105 = vmatpush1.bf16.msra.mxu0 %v300
      %1106 = vmatprep.subr.bf16.mxu0 0
      %1107 = vmatpush1.bf16.msra.mxu0 %v299
      %1108 = vmatprep.subr.bf16.mxu0 0
      %1109 = vmatpush2.bf16.msra.mxu0 0
      %1110 = vmatprep.subr.bf16.mxu0 0
      %1111 = vmatpush2.bf16.msra.mxu0 0
      %1112 = vmatprep.subr.bf16.mxu0 0
      %1113 = vmatpush2.bf16.msra.mxu0 0
      %1114 = vmatprep.subr.bf16.mxu0 0
      %1115 = vmatpush2.bf16.msra.mxu0 0
      %1116 = vmatprep.subr.bf16.mxu0 0
      %1117 = vmatpush2.bf16.msra.mxu0 0
      %1118 = vmatprep.subr.bf16.mxu0 0
      %1119 = vmatpush2.bf16.msra.mxu0 0
      %1120 = vmatprep.subr.bf16.mxu0 0
      %1121 = vmatpush2.bf16.msra.mxu0 0
      %1122 = vmatprep.subr.bf16.mxu0 0
      %1123 = vmatpush2.bf16.msra.mxu0 0
      %1124 = vmatprep.mubr.bf16.mxu0 0
      %1125 = vmatmul.mubr.bf16.gmra.mxu0 %v1090
      %v1126 = vpop.f32.mrf.mxu0
      %v1127 = vadd.f32 0.0, %v1126
      %v1128 = vpop.f32.mrf.mxu0
      %v1129 = vpop.f32.mrf.mxu0
      %v1130 = vpop.f32.mrf.mxu0
      %1131 = vdwg.mxu0
      %v1132 = vadd.f32 %v1086, %v1127
      %s1133 = scalar_lea.vmem %s251, 3
      %v1134 = vld [vmem:[%s1133] sm:$0x1]
      %v1135 = vunpack.c.l.bf16 %v1134
      %1136 = vrot.lane.b32.xlu0 %v1063, 32
      %v1137 = vpop.permute.xlu0 %1136
      %v1139 = vsel %vm303, %v1137, 0
      %1141 = vmatprep.subr.bf16.mxu0 0
      %1142 = vmatpush1.bf16.msra.mxu0 0
      %1143 = vmatprep.subr.bf16.mxu0 0
      %1144 = vmatpush1.bf16.msra.mxu0 0
      %1145 = vmatprep.subr.bf16.mxu0 0
      %1146 = vmatpush1.bf16.msra.mxu0 0
      %1147 = vmatprep.subr.bf16.mxu0 0
      %1148 = vmatpush1.bf16.msra.mxu0 0
      %1149 = vmatprep.subr.bf16.mxu0 0
      %1150 = vmatpush1.bf16.msra.mxu0 0
      %1151 = vmatprep.subr.bf16.mxu0 0
      %1152 = vmatpush1.bf16.msra.mxu0 0
      %1153 = vmatprep.subr.bf16.mxu0 0
      %1154 = vmatpush1.bf16.msra.mxu0 %v361
      %1155 = vmatprep.subr.bf16.mxu0 0
      %1156 = vmatpush1.bf16.msra.mxu0 %v360
      %1157 = vmatprep.subr.bf16.mxu0 0
      %1158 = vmatpush2.bf16.msra.mxu0 0
      %1159 = vmatprep.subr.bf16.mxu0 0
      %1160 = vmatpush2.bf16.msra.mxu0 0
      %1161 = vmatprep.subr.bf16.mxu0 0
      %1162 = vmatpush2.bf16.msra.mxu0 0
      %1163 = vmatprep.subr.bf16.mxu0 0
      %1164 = vmatpush2.bf16.msra.mxu0 0
      %1165 = vmatprep.subr.bf16.mxu0 0
      %1166 = vmatpush2.bf16.msra.mxu0 0
      %1167 = vmatprep.subr.bf16.mxu0 0
      %1168 = vmatpush2.bf16.msra.mxu0 0
      %1169 = vmatprep.subr.bf16.mxu0 0
      %1170 = vmatpush2.bf16.msra.mxu0 0
      %1171 = vmatprep.subr.bf16.mxu0 0
      %1172 = vmatpush2.bf16.msra.mxu0 0
      %1173 = vmatprep.mubr.bf16.mxu0 0
      %1174 = vmatmul.mubr.bf16.gmra.mxu0 %v1139
      %v1175 = vpop.f32.mrf.mxu0
      %v1176 = vadd.f32 0.0, %v1175
      %v1177 = vpop.f32.mrf.mxu0
      %v1178 = vpop.f32.mrf.mxu0
      %v1179 = vpop.f32.mrf.mxu0
      %1180 = vdwg.mxu0
      %v1181 = vadd.f32 %v1135, %v1176
      %v1182 = vxor.u32 %v1132, 2147483648
      %v1183 = vmul.f32 %v1182, 1.442695
      %v1184 = vpow.pop %v1183
      %v1185 = vadd.f32 %v1184, 1.0
      %v1186 = vrcp.pop %v1185
      %v1187 = vmul.f32 1.0, %v1186
      %v1188 = vtanh.pop %v1132
      %v1189 = vmul.f32 %v1187, %v1011
      %1191 = vrot.lane.b32.xlu0 %v1188, 64
      %v1192 = vpop.permute.xlu0 %1191
      %v1194 = vmul.f32 %v1187, %v1192
      %1196 = vrot.lane.b32.xlu0 %v1194, 32
      %v1197 = vpop.permute.xlu0 %1196
      %v1199 = vadd.f32 %v1189, %v1197
      %v1200 = vtanh.pop %v1199
      %1202 = vrot.lane.b32.xlu0 %v1200, 64
      %v1203 = vpop.permute.xlu0 %1202
      %v1205 = vmul.f32 %v1187, %v1203
      %v1206 = vxor.u32 %v1181, 2147483648
      %v1207 = vmul.f32 %v1206, 1.442695
      %v1208 = vpow.pop %v1207
      %v1209 = vadd.f32 %v1208, 1.0
      %v1210 = vrcp.pop %v1209
      %v1211 = vmul.f32 1.0, %v1210
      %v1212 = vtanh.pop %v1181
      %v1213 = vmul.f32 %v1211, %v1035
      %1215 = vrot.lane.b32.xlu0 %v1212, 64
      %v1216 = vpop.permute.xlu0 %1215
      %v1218 = vmul.f32 %v1211, %v1216
      %1220 = vrot.lane.b32.xlu0 %v1218, 32
      %v1221 = vpop.permute.xlu0 %1220
      %v1223 = vadd.f32 %v1213, %v1221
      %v1224 = vtanh.pop %v1223
      %1226 = vrot.lane.b32.xlu0 %v1224, 64
      %v1227 = vpop.permute.xlu0 %1226
      %v1229 = vmul.f32 %v1211, %v1227
      %v1230 = vpack.c.bf16 %v1205, %v1205
      %v1233 = vunpack.c.l.s4 1966171168
      %v1234 = vunpack.c.0.s8 %v1233
      %v1235 = vlaneseq
      %v1236 = vshrl.u32 %v1235, 7
      %v1237 = vsub.s32 %v1234, %v1236
      %v1238 = vrot.slane %v1230, %v1237
      %v1240 = vunpack.c.l.s4 1966171168
      %v1241 = vunpack.c.0.s8 %v1240
      %v1242 = vlaneseq
      %v1243 = vshrl.u32 %v1242, 7
      %v1244 = vsub.s32 %v1241, %v1243
      %v1245 = vrot.slane %v1238, %v1244
      %1246 = vrot.lane.b32.xlu0 %v1245, 32
      %v1247 = vpop.permute.xlu0 %1246
      %s1249 = scalar_lea.vmem %s257, 4
      %1250 = vst.msk [vmem:[%s1249] sm:$0x1] %vm497, %v1247
      %v1251 = vpack.c.bf16 %v1229, %v1229
      %v1254 = vunpack.c.l.s4 1966171168
      %v1255 = vunpack.c.0.s8 %v1254
      %v1256 = vlaneseq
      %v1257 = vshrl.u32 %v1256, 7
      %v1258 = vsub.s32 %v1255, %v1257
      %v1259 = vrot.slane %v1251, %v1258
      %v1261 = vunpack.c.l.s4 1966171168
      %v1262 = vunpack.c.0.s8 %v1261
      %v1263 = vlaneseq
      %v1264 = vshrl.u32 %v1263, 7
      %v1265 = vsub.s32 %v1262, %v1264
      %v1266 = vrot.slane %v1259, %v1265
      %1267 = vrot.lane.b32.xlu0 %v1266, 32
      %v1268 = vpop.permute.xlu0 %1267
      %s1270 = scalar_lea.vmem %s263, 3
      %1271 = vst.msk [vmem:[%s1270] sm:$0x1] %vm497, %v1268
      %s1272 = scalar_lea.vmem %s245, 5
      %v1273 = vld [vmem:[%s1272] sm:$0x1]
      %v1274 = vunpack.c.l.bf16 %v1273
      %1275 = vrot.lane.b32.xlu0 %v1230, 32
      %v1276 = vpop.permute.xlu0 %1275
      %v1278 = vsel %vm303, %v1276, 0
      %1280 = vmatprep.subr.bf16.mxu0 0
      %1281 = vmatpush1.bf16.msra.mxu0 0
      %1282 = vmatprep.subr.bf16.mxu0 0
      %1283 = vmatpush1.bf16.msra.mxu0 0
      %1284 = vmatprep.subr.bf16.mxu0 0
      %1285 = vmatpush1.bf16.msra.mxu0 0
      %1286 = vmatprep.subr.bf16.mxu0 0
      %1287 = vmatpush1.bf16.msra.mxu0 0
      %1288 = vmatprep.subr.bf16.mxu0 0
      %1289 = vmatpush1.bf16.msra.mxu0 0
      %1290 = vmatprep.subr.bf16.mxu0 0
      %1291 = vmatpush1.bf16.msra.mxu0 0
      %1292 = vmatprep.subr.bf16.mxu0 0
      %1293 = vmatpush1.bf16.msra.mxu0 %v300
      %1294 = vmatprep.subr.bf16.mxu0 0
      %1295 = vmatpush1.bf16.msra.mxu0 %v299
      %1296 = vmatprep.subr.bf16.mxu0 0
      %1297 = vmatpush2.bf16.msra.mxu0 0
      %1298 = vmatprep.subr.bf16.mxu0 0
      %1299 = vmatpush2.bf16.msra.mxu0 0
      %1300 = vmatprep.subr.bf16.mxu0 0
      %1301 = vmatpush2.bf16.msra.mxu0 0
      %1302 = vmatprep.subr.bf16.mxu0 0
      %1303 = vmatpush2.bf16.msra.mxu0 0
      %1304 = vmatprep.subr.bf16.mxu0 0
      %1305 = vmatpush2.bf16.msra.mxu0 0
      %1306 = vmatprep.subr.bf16.mxu0 0
      %1307 = vmatpush2.bf16.msra.mxu0 0
      %1308 = vmatprep.subr.bf16.mxu0 0
      %1309 = vmatpush2.bf16.msra.mxu0 0
      %1310 = vmatprep.subr.bf16.mxu0 0
      %1311 = vmatpush2.bf16.msra.mxu0 0
      %1312 = vmatprep.mubr.bf16.mxu0 0
      %1313 = vmatmul.mubr.bf16.gmra.mxu0 %v1278
      %v1314 = vpop.f32.mrf.mxu0
      %v1315 = vadd.f32 0.0, %v1314
      %v1316 = vpop.f32.mrf.mxu0
      %v1317 = vpop.f32.mrf.mxu0
      %v1318 = vpop.f32.mrf.mxu0
      %1319 = vdwg.mxu0
      %v1320 = vadd.f32 %v1274, %v1315
      %s1321 = scalar_lea.vmem %s251, 2
      %v1322 = vld [vmem:[%s1321] sm:$0x1]
      %v1323 = vunpack.c.l.bf16 %v1322
      %1324 = vrot.lane.b32.xlu0 %v1251, 32
      %v1325 = vpop.permute.xlu0 %1324
      %v1327 = vsel %vm303, %v1325, 0
      %1329 = vmatprep.subr.bf16.mxu0 0
      %1330 = vmatpush1.bf16.msra.mxu0 0
      %1331 = vmatprep.subr.bf16.mxu0 0
      %1332 = vmatpush1.bf16.msra.mxu0 0
      %1333 = vmatprep.subr.bf16.mxu0 0
      %1334 = vmatpush1.bf16.msra.mxu0 0
      %1335 = vmatprep.subr.bf16.mxu0 0
      %1336 = vmatpush1.bf16.msra.mxu0 0
      %1337 = vmatprep.subr.bf16.mxu0 0
      %1338 = vmatpush1.bf16.msra.mxu0 0
      %1339 = vmatprep.subr.bf16.mxu0 0
      %1340 = vmatpush1.bf16.msra.mxu0 0
      %1341 = vmatprep.subr.bf16.mxu0 0
      %1342 = vmatpush1.bf16.msra.mxu0 %v361
      %1343 = vmatprep.subr.bf16.mxu0 0
      %1344 = vmatpush1.bf16.msra.mxu0 %v360
      %1345 = vmatprep.subr.bf16.mxu0 0
      %1346 = vmatpush2.bf16.msra.mxu0 0
      %1347 = vmatprep.subr.bf16.mxu0 0
      %1348 = vmatpush2.bf16.msra.mxu0 0
      %1349 = vmatprep.subr.bf16.mxu0 0
      %1350 = vmatpush2.bf16.msra.mxu0 0
      %1351 = vmatprep.subr.bf16.mxu0 0
      %1352 = vmatpush2.bf16.msra.mxu0 0
      %1353 = vmatprep.subr.bf16.mxu0 0
      %1354 = vmatpush2.bf16.msra.mxu0 0
      %1355 = vmatprep.subr.bf16.mxu0 0
      %1356 = vmatpush2.bf16.msra.mxu0 0
      %1357 = vmatprep.subr.bf16.mxu0 0
      %1358 = vmatpush2.bf16.msra.mxu0 0
      %1359 = vmatprep.subr.bf16.mxu0 0
      %1360 = vmatpush2.bf16.msra.mxu0 0
      %1361 = vmatprep.mubr.bf16.mxu0 0
      %1362 = vmatmul.mubr.bf16.gmra.mxu0 %v1327
      %v1363 = vpop.f32.mrf.mxu0
      %v1364 = vadd.f32 0.0, %v1363
      %v1365 = vpop.f32.mrf.mxu0
      %v1366 = vpop.f32.mrf.mxu0
      %v1367 = vpop.f32.mrf.mxu0
      %1368 = vdwg.mxu0
      %v1369 = vadd.f32 %v1323, %v1364
      %v1370 = vxor.u32 %v1320, 2147483648
      %v1371 = vmul.f32 %v1370, 1.442695
      %v1372 = vpow.pop %v1371
      %v1373 = vadd.f32 %v1372, 1.0
      %v1374 = vrcp.pop %v1373
      %v1375 = vmul.f32 1.0, %v1374
      %v1376 = vtanh.pop %v1320
      %v1377 = vmul.f32 %v1375, %v1199
      %1379 = vrot.lane.b32.xlu0 %v1376, 64
      %v1380 = vpop.permute.xlu0 %1379
      %v1382 = vmul.f32 %v1375, %v1380
      %1384 = vrot.lane.b32.xlu0 %v1382, 32
      %v1385 = vpop.permute.xlu0 %1384
      %v1387 = vadd.f32 %v1377, %v1385
      %v1388 = vtanh.pop %v1387
      %1390 = vrot.lane.b32.xlu0 %v1388, 64
      %v1391 = vpop.permute.xlu0 %1390
      %v1393 = vmul.f32 %v1375, %v1391
      %v1394 = vxor.u32 %v1369, 2147483648
      %v1395 = vmul.f32 %v1394, 1.442695
      %v1396 = vpow.pop %v1395
      %v1397 = vadd.f32 %v1396, 1.0
      %v1398 = vrcp.pop %v1397
      %v1399 = vmul.f32 1.0, %v1398
      %v1400 = vtanh.pop %v1369
      %v1401 = vmul.f32 %v1399, %v1223
      %1403 = vrot.lane.b32.xlu0 %v1400, 64
      %v1404 = vpop.permute.xlu0 %1403
      %v1406 = vmul.f32 %v1399, %v1404
      %1408 = vrot.lane.b32.xlu0 %v1406, 32
      %v1409 = vpop.permute.xlu0 %1408
      %v1411 = vadd.f32 %v1401, %v1409
      %v1412 = vtanh.pop %v1411
      %1414 = vrot.lane.b32.xlu0 %v1412, 64
      %v1415 = vpop.permute.xlu0 %1414
      %v1417 = vmul.f32 %v1399, %v1415
      %v1418 = vpack.c.bf16 %v1393, %v1393
      %v1421 = vunpack.c.l.s4 1966171168
      %v1422 = vunpack.c.0.s8 %v1421
      %v1423 = vlaneseq
      %v1424 = vshrl.u32 %v1423, 7
      %v1425 = vsub.s32 %v1422, %v1424
      %v1426 = vrot.slane %v1418, %v1425
      %v1428 = vunpack.c.l.s4 1966171168
      %v1429 = vunpack.c.0.s8 %v1428
      %v1430 = vlaneseq
      %v1431 = vshrl.u32 %v1430, 7
      %v1432 = vsub.s32 %v1429, %v1431
      %v1433 = vrot.slane %v1426, %v1432
      %1434 = vrot.lane.b32.xlu0 %v1433, 32
      %v1435 = vpop.permute.xlu0 %1434
      %s1437 = scalar_lea.vmem %s257, 5
      %1438 = vst.msk [vmem:[%s1437] sm:$0x1] %vm497, %v1435
      %v1439 = vpack.c.bf16 %v1417, %v1417
      %v1442 = vunpack.c.l.s4 1966171168
      %v1443 = vunpack.c.0.s8 %v1442
      %v1444 = vlaneseq
      %v1445 = vshrl.u32 %v1444, 7
      %v1446 = vsub.s32 %v1443, %v1445
      %v1447 = vrot.slane %v1439, %v1446
      %v1449 = vunpack.c.l.s4 1966171168
      %v1450 = vunpack.c.0.s8 %v1449
      %v1451 = vlaneseq
      %v1452 = vshrl.u32 %v1451, 7
      %v1453 = vsub.s32 %v1450, %v1452
      %v1454 = vrot.slane %v1447, %v1453
      %1455 = vrot.lane.b32.xlu0 %v1454, 32
      %v1456 = vpop.permute.xlu0 %1455
      %s1458 = scalar_lea.vmem %s263, 2
      %1459 = vst.msk [vmem:[%s1458] sm:$0x1] %vm497, %v1456
      %s1460 = scalar_lea.vmem %s245, 6
      %v1461 = vld [vmem:[%s1460] sm:$0x1]
      %v1462 = vunpack.c.l.bf16 %v1461
      %1463 = vrot.lane.b32.xlu0 %v1418, 32
      %v1464 = vpop.permute.xlu0 %1463
      %v1466 = vsel %vm303, %v1464, 0
      %1468 = vmatprep.subr.bf16.mxu0 0
      %1469 = vmatpush1.bf16.msra.mxu0 0
      %1470 = vmatprep.subr.bf16.mxu0 0
      %1471 = vmatpush1.bf16.msra.mxu0 0
      %1472 = vmatprep.subr.bf16.mxu0 0
      %1473 = vmatpush1.bf16.msra.mxu0 0
      %1474 = vmatprep.subr.bf16.mxu0 0
      %1475 = vmatpush1.bf16.msra.mxu0 0
      %1476 = vmatprep.subr.bf16.mxu0 0
      %1477 = vmatpush1.bf16.msra.mxu0 0
      %1478 = vmatprep.subr.bf16.mxu0 0
      %1479 = vmatpush1.bf16.msra.mxu0 0
      %1480 = vmatprep.subr.bf16.mxu0 0
      %1481 = vmatpush1.bf16.msra.mxu0 %v300
      %1482 = vmatprep.subr.bf16.mxu0 0
      %1483 = vmatpush1.bf16.msra.mxu0 %v299
      %1484 = vmatprep.subr.bf16.mxu0 0
      %1485 = vmatpush2.bf16.msra.mxu0 0
      %1486 = vmatprep.subr.bf16.mxu0 0
      %1487 = vmatpush2.bf16.msra.mxu0 0
      %1488 = vmatprep.subr.bf16.mxu0 0
      %1489 = vmatpush2.bf16.msra.mxu0 0
      %1490 = vmatprep.subr.bf16.mxu0 0
      %1491 = vmatpush2.bf16.msra.mxu0 0
      %1492 = vmatprep.subr.bf16.mxu0 0
      %1493 = vmatpush2.bf16.msra.mxu0 0
      %1494 = vmatprep.subr.bf16.mxu0 0
      %1495 = vmatpush2.bf16.msra.mxu0 0
      %1496 = vmatprep.subr.bf16.mxu0 0
      %1497 = vmatpush2.bf16.msra.mxu0 0
      %1498 = vmatprep.subr.bf16.mxu0 0
      %1499 = vmatpush2.bf16.msra.mxu0 0
      %1500 = vmatprep.mubr.bf16.mxu0 0
      %1501 = vmatmul.mubr.bf16.gmra.mxu0 %v1466
      %v1502 = vpop.f32.mrf.mxu0
      %v1503 = vadd.f32 0.0, %v1502
      %v1504 = vpop.f32.mrf.mxu0
      %v1505 = vpop.f32.mrf.mxu0
      %v1506 = vpop.f32.mrf.mxu0
      %1507 = vdwg.mxu0
      %v1508 = vadd.f32 %v1462, %v1503
      %s1509 = scalar_lea.vmem %s251, 1
      %v1510 = vld [vmem:[%s1509] sm:$0x1]
      %v1511 = vunpack.c.l.bf16 %v1510
      %1512 = vrot.lane.b32.xlu0 %v1439, 32
      %v1513 = vpop.permute.xlu0 %1512
      %v1515 = vsel %vm303, %v1513, 0
      %1517 = vmatprep.subr.bf16.mxu0 0
      %1518 = vmatpush1.bf16.msra.mxu0 0
      %1519 = vmatprep.subr.bf16.mxu0 0
      %1520 = vmatpush1.bf16.msra.mxu0 0
      %1521 = vmatprep.subr.bf16.mxu0 0
      %1522 = vmatpush1.bf16.msra.mxu0 0
      %1523 = vmatprep.subr.bf16.mxu0 0
      %1524 = vmatpush1.bf16.msra.mxu0 0
      %1525 = vmatprep.subr.bf16.mxu0 0
      %1526 = vmatpush1.bf16.msra.mxu0 0
      %1527 = vmatprep.subr.bf16.mxu0 0
      %1528 = vmatpush1.bf16.msra.mxu0 0
      %1529 = vmatprep.subr.bf16.mxu0 0
      %1530 = vmatpush1.bf16.msra.mxu0 %v361
      %1531 = vmatprep.subr.bf16.mxu0 0
      %1532 = vmatpush1.bf16.msra.mxu0 %v360
      %1533 = vmatprep.subr.bf16.mxu0 0
      %1534 = vmatpush2.bf16.msra.mxu0 0
      %1535 = vmatprep.subr.bf16.mxu0 0
      %1536 = vmatpush2.bf16.msra.mxu0 0
      %1537 = vmatprep.subr.bf16.mxu0 0
      %1538 = vmatpush2.bf16.msra.mxu0 0
      %1539 = vmatprep.subr.bf16.mxu0 0
      %1540 = vmatpush2.bf16.msra.mxu0 0
      %1541 = vmatprep.subr.bf16.mxu0 0
      %1542 = vmatpush2.bf16.msra.mxu0 0
      %1543 = vmatprep.subr.bf16.mxu0 0
      %1544 = vmatpush2.bf16.msra.mxu0 0
      %1545 = vmatprep.subr.bf16.mxu0 0
      %1546 = vmatpush2.bf16.msra.mxu0 0
      %1547 = vmatprep.subr.bf16.mxu0 0
      %1548 = vmatpush2.bf16.msra.mxu0 0
      %1549 = vmatprep.mubr.bf16.mxu0 0
      %1550 = vmatmul.mubr.bf16.gmra.mxu0 %v1515
      %v1551 = vpop.f32.mrf.mxu0
      %v1552 = vadd.f32 0.0, %v1551
      %v1553 = vpop.f32.mrf.mxu0
      %v1554 = vpop.f32.mrf.mxu0
      %v1555 = vpop.f32.mrf.mxu0
      %1556 = vdwg.mxu0
      %v1557 = vadd.f32 %v1511, %v1552
      %v1558 = vxor.u32 %v1508, 2147483648
      %v1559 = vmul.f32 %v1558, 1.442695
      %v1560 = vpow.pop %v1559
      %v1561 = vadd.f32 %v1560, 1.0
      %v1562 = vrcp.pop %v1561
      %v1563 = vmul.f32 1.0, %v1562
      %v1564 = vtanh.pop %v1508
      %v1565 = vmul.f32 %v1563, %v1387
      %1567 = vrot.lane.b32.xlu0 %v1564, 64
      %v1568 = vpop.permute.xlu0 %1567
      %v1570 = vmul.f32 %v1563, %v1568
      %1572 = vrot.lane.b32.xlu0 %v1570, 32
      %v1573 = vpop.permute.xlu0 %1572
      %v1575 = vadd.f32 %v1565, %v1573
      %v1576 = vtanh.pop %v1575
      %1578 = vrot.lane.b32.xlu0 %v1576, 64
      %v1579 = vpop.permute.xlu0 %1578
      %v1581 = vmul.f32 %v1563, %v1579
      %v1582 = vxor.u32 %v1557, 2147483648
      %v1583 = vmul.f32 %v1582, 1.442695
      %v1584 = vpow.pop %v1583
      %v1585 = vadd.f32 %v1584, 1.0
      %v1586 = vrcp.pop %v1585
      %v1587 = vmul.f32 1.0, %v1586
      %v1588 = vtanh.pop %v1557
      %v1589 = vmul.f32 %v1587, %v1411
      %1591 = vrot.lane.b32.xlu0 %v1588, 64
      %v1592 = vpop.permute.xlu0 %1591
      %v1594 = vmul.f32 %v1587, %v1592
      %1596 = vrot.lane.b32.xlu0 %v1594, 32
      %v1597 = vpop.permute.xlu0 %1596
      %v1599 = vadd.f32 %v1589, %v1597
      %v1600 = vtanh.pop %v1599
      %1602 = vrot.lane.b32.xlu0 %v1600, 64
      %v1603 = vpop.permute.xlu0 %1602
      %v1605 = vmul.f32 %v1587, %v1603
      %v1606 = vpack.c.bf16 %v1581, %v1581
      %v1609 = vunpack.c.l.s4 1966171168
      %v1610 = vunpack.c.0.s8 %v1609
      %v1611 = vlaneseq
      %v1612 = vshrl.u32 %v1611, 7
      %v1613 = vsub.s32 %v1610, %v1612
      %v1614 = vrot.slane %v1606, %v1613
      %v1616 = vunpack.c.l.s4 1966171168
      %v1617 = vunpack.c.0.s8 %v1616
      %v1618 = vlaneseq
      %v1619 = vshrl.u32 %v1618, 7
      %v1620 = vsub.s32 %v1617, %v1619
      %v1621 = vrot.slane %v1614, %v1620
      %1622 = vrot.lane.b32.xlu0 %v1621, 32
      %v1623 = vpop.permute.xlu0 %1622
      %s1625 = scalar_lea.vmem %s257, 6
      %1626 = vst.msk [vmem:[%s1625] sm:$0x1] %vm497, %v1623
      %v1627 = vpack.c.bf16 %v1605, %v1605
      %v1630 = vunpack.c.l.s4 1966171168
      %v1631 = vunpack.c.0.s8 %v1630
      %v1632 = vlaneseq
      %v1633 = vshrl.u32 %v1632, 7
      %v1634 = vsub.s32 %v1631, %v1633
      %v1635 = vrot.slane %v1627, %v1634
      %v1637 = vunpack.c.l.s4 1966171168
      %v1638 = vunpack.c.0.s8 %v1637
      %v1639 = vlaneseq
      %v1640 = vshrl.u32 %v1639, 7
      %v1641 = vsub.s32 %v1638, %v1640
      %v1642 = vrot.slane %v1635, %v1641
      %1643 = vrot.lane.b32.xlu0 %v1642, 32
      %v1644 = vpop.permute.xlu0 %1643
      %s1646 = scalar_lea.vmem %s263, 1
      %1647 = vst.msk [vmem:[%s1646] sm:$0x1] %vm497, %v1644
      %s1648 = scalar_lea.vmem %s245, 7
      %v1649 = vld [vmem:[%s1648] sm:$0x1]
      %v1650 = vunpack.c.l.bf16 %v1649
      %1651 = vrot.lane.b32.xlu0 %v1606, 32
      %v1652 = vpop.permute.xlu0 %1651
      %v1654 = vsel %vm303, %v1652, 0
      %1656 = vmatprep.subr.bf16.mxu0 0
      %1657 = vmatpush1.bf16.msra.mxu0 0
      %1658 = vmatprep.subr.bf16.mxu0 0
      %1659 = vmatpush1.bf16.msra.mxu0 0
      %1660 = vmatprep.subr.bf16.mxu0 0
      %1661 = vmatpush1.bf16.msra.mxu0 0
      %1662 = vmatprep.subr.bf16.mxu0 0
      %1663 = vmatpush1.bf16.msra.mxu0 0
      %1664 = vmatprep.subr.bf16.mxu0 0
      %1665 = vmatpush1.bf16.msra.mxu0 0
      %1666 = vmatprep.subr.bf16.mxu0 0
      %1667 = vmatpush1.bf16.msra.mxu0 0
      %1668 = vmatprep.subr.bf16.mxu0 0
      %1669 = vmatpush1.bf16.msra.mxu0 %v300
      %1670 = vmatprep.subr.bf16.mxu0 0
      %1671 = vmatpush1.bf16.msra.mxu0 %v299
      %1672 = vmatprep.subr.bf16.mxu0 0
      %1673 = vmatpush2.bf16.msra.mxu0 0
      %1674 = vmatprep.subr.bf16.mxu0 0
      %1675 = vmatpush2.bf16.msra.mxu0 0
      %1676 = vmatprep.subr.bf16.mxu0 0
      %1677 = vmatpush2.bf16.msra.mxu0 0
      %1678 = vmatprep.subr.bf16.mxu0 0
      %1679 = vmatpush2.bf16.msra.mxu0 0
      %1680 = vmatprep.subr.bf16.mxu0 0
      %1681 = vmatpush2.bf16.msra.mxu0 0
      %1682 = vmatprep.subr.bf16.mxu0 0
      %1683 = vmatpush2.bf16.msra.mxu0 0
      %1684 = vmatprep.subr.bf16.mxu0 0
      %1685 = vmatpush2.bf16.msra.mxu0 0
      %1686 = vmatprep.subr.bf16.mxu0 0
      %1687 = vmatpush2.bf16.msra.mxu0 0
      %1688 = vmatprep.mubr.bf16.mxu0 0
      %1689 = vmatmul.mubr.bf16.gmra.mxu0 %v1654
      %v1690 = vpop.f32.mrf.mxu0
      %v1691 = vadd.f32 0.0, %v1690
      %v1692 = vpop.f32.mrf.mxu0
      %v1693 = vpop.f32.mrf.mxu0
      %v1694 = vpop.f32.mrf.mxu0
      %1695 = vdwg.mxu0
      %v1696 = vadd.f32 %v1650, %v1691
      %v1697 = vld [vmem:[%s251] sm:$0x1]
      %v1698 = vunpack.c.l.bf16 %v1697
      %1699 = vrot.lane.b32.xlu0 %v1627, 32
      %v1700 = vpop.permute.xlu0 %1699
      %v1702 = vsel %vm303, %v1700, 0
      %1704 = vmatprep.subr.bf16.mxu0 0
      %1705 = vmatpush1.bf16.msra.mxu0 0
      %1706 = vmatprep.subr.bf16.mxu0 0
      %1707 = vmatpush1.bf16.msra.mxu0 0
      %1708 = vmatprep.subr.bf16.mxu0 0
      %1709 = vmatpush1.bf16.msra.mxu0 0
      %1710 = vmatprep.subr.bf16.mxu0 0
      %1711 = vmatpush1.bf16.msra.mxu0 0
      %1712 = vmatprep.subr.bf16.mxu0 0
      %1713 = vmatpush1.bf16.msra.mxu0 0
      %1714 = vmatprep.subr.bf16.mxu0 0
      %1715 = vmatpush1.bf16.msra.mxu0 0
      %1716 = vmatprep.subr.bf16.mxu0 0
      %1717 = vmatpush1.bf16.msra.mxu0 %v361
      %1718 = vmatprep.subr.bf16.mxu0 0
      %1719 = vmatpush1.bf16.msra.mxu0 %v360
      %1720 = vmatprep.subr.bf16.mxu0 0
      %1721 = vmatpush2.bf16.msra.mxu0 0
      %1722 = vmatprep.subr.bf16.mxu0 0
      %1723 = vmatpush2.bf16.msra.mxu0 0
      %1724 = vmatprep.subr.bf16.mxu0 0
      %1725 = vmatpush2.bf16.msra.mxu0 0
      %1726 = vmatprep.subr.bf16.mxu0 0
      %1727 = vmatpush2.bf16.msra.mxu0 0
      %1728 = vmatprep.subr.bf16.mxu0 0
      %1729 = vmatpush2.bf16.msra.mxu0 0
      %1730 = vmatprep.subr.bf16.mxu0 0
      %1731 = vmatpush2.bf16.msra.mxu0 0
      %1732 = vmatprep.subr.bf16.mxu0 0
      %1733 = vmatpush2.bf16.msra.mxu0 0
      %1734 = vmatprep.subr.bf16.mxu0 0
      %1735 = vmatpush2.bf16.msra.mxu0 0
      %1736 = vmatprep.mubr.bf16.mxu0 0
      %1737 = vmatmul.mubr.bf16.gmra.mxu0 %v1702
      %v1738 = vpop.f32.mrf.mxu0
      %v1739 = vadd.f32 0.0, %v1738
      %v1740 = vpop.f32.mrf.mxu0
      %v1741 = vpop.f32.mrf.mxu0
      %v1742 = vpop.f32.mrf.mxu0
      %1743 = vdwg.mxu0
      %v1744 = vadd.f32 %v1698, %v1739
      %v1745 = vxor.u32 %v1696, 2147483648
      %v1746 = vmul.f32 %v1745, 1.442695
      %v1747 = vpow.pop %v1746
      %v1748 = vadd.f32 %v1747, 1.0
      %v1749 = vrcp.pop %v1748
      %v1750 = vmul.f32 1.0, %v1749
      %v1751 = vtanh.pop %v1696
      %v1752 = vmul.f32 %v1750, %v1575
      %1754 = vrot.lane.b32.xlu0 %v1751, 64
      %v1755 = vpop.permute.xlu0 %1754
      %v1757 = vmul.f32 %v1750, %v1755
      %1759 = vrot.lane.b32.xlu0 %v1757, 32
      %v1760 = vpop.permute.xlu0 %1759
      %v1762 = vadd.f32 %v1752, %v1760
      %v1763 = vtanh.pop %v1762
      %1765 = vrot.lane.b32.xlu0 %v1763, 64
      %v1766 = vpop.permute.xlu0 %1765
      %v1768 = vmul.f32 %v1750, %v1766
      %v1769 = vxor.u32 %v1744, 2147483648
      %v1770 = vmul.f32 %v1769, 1.442695
      %v1771 = vpow.pop %v1770
      %v1772 = vadd.f32 %v1771, 1.0
      %v1773 = vrcp.pop %v1772
      %v1774 = vmul.f32 1.0, %v1773
      %v1775 = vtanh.pop %v1744
      %v1776 = vmul.f32 %v1774, %v1599
      %1778 = vrot.lane.b32.xlu0 %v1775, 64
      %v1779 = vpop.permute.xlu0 %1778
      %v1781 = vmul.f32 %v1774, %v1779
      %1783 = vrot.lane.b32.xlu0 %v1781, 32
      %v1784 = vpop.permute.xlu0 %1783
      %v1786 = vadd.f32 %v1776, %v1784
      %v1787 = vtanh.pop %v1786
      %1789 = vrot.lane.b32.xlu0 %v1787, 64
      %v1790 = vpop.permute.xlu0 %1789
      %v1792 = vmul.f32 %v1774, %v1790
      %v1793 = vpack.c.bf16 %v1768, %v1768
      %v1796 = vunpack.c.l.s4 1966171168
      %v1797 = vunpack.c.0.s8 %v1796
      %v1798 = vlaneseq
      %v1799 = vshrl.u32 %v1798, 7
      %v1800 = vsub.s32 %v1797, %v1799
      %v1801 = vrot.slane %v1793, %v1800
      %v1803 = vunpack.c.l.s4 1966171168
      %v1804 = vunpack.c.0.s8 %v1803
      %v1805 = vlaneseq
      %v1806 = vshrl.u32 %v1805, 7
      %v1807 = vsub.s32 %v1804, %v1806
      %v1808 = vrot.slane %v1801, %v1807
      %1809 = vrot.lane.b32.xlu0 %v1808, 32
      %v1810 = vpop.permute.xlu0 %1809
      %s1812 = scalar_lea.vmem %s257, 7
      %1813 = vst.msk [vmem:[%s1812] sm:$0x1] %vm497, %v1810
      %v1814 = vpack.c.bf16 %v1792, %v1792
      %v1817 = vunpack.c.l.s4 1966171168
      %v1818 = vunpack.c.0.s8 %v1817
      %v1819 = vlaneseq
      %v1820 = vshrl.u32 %v1819, 7
      %v1821 = vsub.s32 %v1818, %v1820
      %v1822 = vrot.slane %v1814, %v1821
      %v1824 = vunpack.c.l.s4 1966171168
      %v1825 = vunpack.c.0.s8 %v1824
      %v1826 = vlaneseq
      %v1827 = vshrl.u32 %v1826, 7
      %v1828 = vsub.s32 %v1825, %v1827
      %v1829 = vrot.slane %v1822, %v1828
      %1830 = vrot.lane.b32.xlu0 %v1829, 32
      %v1831 = vpop.permute.xlu0 %1830
      %1833 = vst.msk [vmem:[%s263] sm:$0x1] %vm497, %v1831
      %v1836 = vunpack.c.l.s4 1983009808
      %v1837 = vunpack.c.0.s8 %v1836
      %v1838 = vlaneseq
      %v1839 = vshrl.u32 %v1838, 7
      %v1840 = vsub.s32 %v1837, %v1839
      %v1841 = vrot.slane %v1768, %v1840
      %1842 = vrot.lane.b32.xlu0 %v1841, 32
      %v1843 = vpop.permute.xlu0 %1842
      %vm1845 = vcmask 254976
      %1846 = vst.msk [vmem:[#allocation2] sm:$0x3] %vm1845, %v1843
      %v1849 = vunpack.c.l.s4 1983009808
      %v1850 = vunpack.c.0.s8 %v1849
      %v1851 = vlaneseq
      %v1852 = vshrl.u32 %v1851, 7
      %v1853 = vsub.s32 %v1850, %v1852
      %v1854 = vrot.slane %v1762, %v1853
      %1855 = vrot.lane.b32.xlu0 %v1854, 96
      %v1856 = vpop.permute.xlu0 %1855
      %1858 = vst.msk [vmem:[#allocation3] sm:$0x3] %vm1845, %v1856
      %v1861 = vunpack.c.l.s4 1983009808
      %v1862 = vunpack.c.0.s8 %v1861
      %v1863 = vlaneseq
      %v1864 = vshrl.u32 %v1863, 7
      %v1865 = vsub.s32 %v1862, %v1864
      %v1866 = vrot.slane %v1792, %v1865
      %1867 = vrot.lane.b32.xlu0 %v1866, 32
      %v1868 = vpop.permute.xlu0 %1867
      %1870 = vst.msk [vmem:[#allocation4] sm:$0x3] %vm1845, %v1868
      %v1873 = vunpack.c.l.s4 1983009808
      %v1874 = vunpack.c.0.s8 %v1873
      %v1875 = vlaneseq
      %v1876 = vshrl.u32 %v1875, 7
      %v1877 = vsub.s32 %v1874, %v1876
      %v1878 = vrot.slane %v1786, %v1877
      %1879 = vrot.lane.b32.xlu0 %v1878, 96
      %v1880 = vpop.permute.xlu0 %1879
      %1882 = vst.msk [vmem:[#allocation5] sm:$0x3] %vm1845, %v1880
      %s1883 = smul.u32 8, %s17
      %p1884 = scmp.lt.s32.totalorder %s1883, 15
      %s1885 = scalar_select %p1884, %s1883, 15
      %s1886 = scalar_lea.vmem %s4, %s1885
      %s1887 = ssub.s32 1, %s17
      %s1888 = smul.u32 8, %s1887
      %p1889 = scmp.lt.s32.totalorder %s1888, 15
      %s1890 = scalar_select %p1889, %s1888, 15
      %s1891 = scalar_lea.vmem %s5, %s1890
      // Predicated region
      $region41: #{_lambda_.2} parent=35 // pred_check
        %p1892 = pneg %p131
      $region42: #{_lambda_.2} parent=35 // pred_check_branch
        %1894 = sbr.rel (%p1892) target = $region44
      $region43: #{_lambda_.2} parent=35 // pred_region
        %s1895 = smul.u32 8, %s17
      $region44: #{_lambda_.2} parent=35 // pred_fallthru
        _
      // Predicated region
      $region45: #{_lambda_.2} parent=35 // pred_check
        %p1896 = pneg %p159
      $region46: #{_lambda_.2} parent=35 // pred_check_branch
        %1898 = sbr.rel (%p1896) target = $region48
      $region47: #{_lambda_.2} parent=35 // pred_region
        %s1899 = ssub.s32 1, %s17
        %s1900 = smul.u32 8, %s1899
      $region48: #{_lambda_.2} parent=35 // pred_fallthru
        _
    $region36: #{_lambda_.2} parent=5 // pred_fallthru
      _
    %p1901 = scmp.le.s32.totalorder 2, %s12
    // Predicated region
    $region49: #{_lambda_.2} parent=5 // pred_check
      %p1902 = pneg %p1901
    $region50: #{_lambda_.2} parent=5 // pred_check_branch
      %1904 = sbr.rel (%p1902) target = $region52
    $region51: #{_lambda_.2} parent=5 // pred_region
      %s1905 = ssub.s32 %s12, 2
      // Predicated region
      $region53: #{_lambda_.2} parent=51 // pred_check
        %p1906 = pneg %p137
      $region54: #{_lambda_.2} parent=51 // pred_check_branch
        %1908 = sbr.rel (%p1906) target = $region56
      $region55: #{_lambda_.2} parent=51 // pred_region
        %s1909 = smul.u32 8, %s18
        %p1910 = scmp.lt.s32.totalorder %s1909, 15
        %s1911 = scalar_select %p1910, %s1909, 15
        %s1912 = scalar_lea.vmem %s4, %s1911
      $region56: #{_lambda_.2} parent=51 // pred_fallthru
        _
      // Predicated region
      $region57: #{_lambda_.2} parent=51 // pred_check
        %p1913 = pneg %p165
      $region58: #{_lambda_.2} parent=51 // pred_check_branch
        %1915 = sbr.rel (%p1913) target = $region60
      $region59: #{_lambda_.2} parent=51 // pred_region
        %s1916 = ssub.s32 1, %s18
        %s1917 = smul.u32 8, %s1916
        %p1918 = scmp.lt.s32.totalorder %s1917, 15
        %s1919 = scalar_select %p1918, %s1917, 15
        %s1920 = scalar_lea.vmem %s5, %s1919
      $region60: #{_lambda_.2} parent=51 // pred_fallthru
        _
    $region52: #{_lambda_.2} parent=5 // pred_fallthru
      _
  $region6: #{_lambda_.2} parent=0 // loop_footer
    %s16 = sadd.s32 1, %s12
  $region7: #{_lambda_.2} parent=0 // loop_footer_branch
    %11 = sbr.rel target = $region3
  $region8: #{_lambda_.2} parent=0 // loop_exit
    _

</llo_original>
